<compile_context>
chip_gen: v7x
topology: tpu7x:2x2x1
jax: 0.10.0
libtpu: 0.0.40
codegen_flags: <defaults>
</compile_context>

<pallas_src>
import jax
import jax.numpy as jnp
from jax.experimental import pallas as pl
from jax.experimental.pallas import tpu as pltpu

# ---- stand-ins for the repo-level globals of the original code -----------------
SBERT_VECTOR_SIZE = 32        # SBERT_VECTOR_SIZE
PRETRAINED_VECTOR_SIZE = 16   # PRETRAINED_VECTOR_SIZE
N_RELATIONS = 6               # len(all_relations)
N_ACTIONS = N_RELATIONS + 1   # 7
IN_FEATS = 9                  # in_feats  (node feature dim = in_feats - 1)
NODE_FEAT = IN_FEATS - 1      # 8
N_HIDDEN = 32
N_OBJECTS = 8
N_STATES = 4
N_NODES = 8                   # graph nodes (g.ndata['feat'].shape[0])
N_GOAL_OBJS = 3               # rows of goalObjectsVec
LSTM_IN = N_ACTIONS + 2 * PRETRAINED_VECTOR_SIZE   # string2embed(pred) size = 39
GUMBEL_TAU = 0.01

F32 = jnp.float32
H = N_HIDDEN
LANE = 128
X_ROWS = 16                   # packed-activation rows
OUT_ROWS = 4                  # packed-output rows (row 3 is padding)

# ---- packed weight-slab row offsets (every section starts on a multiple of 8) ---
R_ADJ = 0      # ( 8, :32)  embed_adj weight
R_SB = 8       # (32, :32)  embed_sbert weight
R_CN = 40      # (16, :32)  embed_conceptnet weight
R_GE = 56      # (40, :32)  graph_embed weight, rows = [h_vec(8) | h_adj(32)]
R_LSTM = 96    # (72, :128) LSTM rows = [pred(39) | h0(32) | pad(1)], lanes = gates i|f|g|o
R_FC = 168     # (128,:32)  fc weight, rows = [h_embed|goal_obj_embed|goal_embed|pred_hist]
R_DEC = 296    # (64, :128) decoder ftd weights: rows 0:32 fwd, 32:64 inv;
               #            lane blocks action@0, obj1@32, obj2@64, state@96
R_WA = 360     # (16, :128) one-hot-action weights: rows 0:8 fwd, 8:16 inv (rows 7/15 unused)
R_WP = 376     # (16, :128) one-hot-pred1 weights: rows 0:8 fwd, 8:16 inv
R_ATTN = 392   # 0=graph_attn[h_vec|h_adj](40 lanes) 1=graph_attn[goal](32)
               # 2=goal_obj_attn[h_embed](32)        3=goal_obj_attn[obj](32)
R_BIAS = 400   # 0=b_adj 1=b_sbert 2=b_conceptnet 3=b_graph_embed 4=b_fc (32 lanes each)
               # 5=b_lstm(128) 6=b_dec_fwd(128) 7=b_dec_inv(128)
R_TOTAL = 408

# ---- packed activation row layout ------------------------------------------------
# rows 0:8   : h_vec @ lanes 0:8, adj @ lanes 8:16
# rows 8:11  : goalObjectsVec @ lanes 0:16
# row  11    : goalVec @ lanes 0:32
# row  12    : [pred(39) | lstm_h0(32)] @ lanes 0:71
# row  13    : lstm_c0 @ lanes 0:32
# rows 14:16 : gumbel noise (row 14 fwd, row 15 inv): action @ 0:7, pred1 @ 32:40


# ------------------------------- fused kernel ------------------------------------
def simple_model_kernel(scal_ref, x_ref, w_ref, out_ref):
    alpha = scal_ref[0]      # shared nn.PReLU alpha
    b_gattn = scal_ref[1]    # graph_attn bias (softmax-invariant, kept for fidelity)
    b_goattn = scal_ref[2]   # goal_obj_attention bias

    def dot(a, b):
        return jnp.dot(a, b, preferred_element_type=jnp.float32)

    def prelu(v):
        return jnp.where(v >= 0, v, alpha * v)

    def sigmoid(v):
        return pl.reciprocal(1.0 + jnp.exp(-v), approx=True)

    def softmax_lanes(v):    # softmax over the feature (last) axis
        e = jnp.exp(v - jnp.max(v, axis=-1, keepdims=True))
        return e * pl.reciprocal(jnp.sum(e, axis=-1, keepdims=True), approx=True)

    def softmax_rows(v):     # softmax over rows (torch dim=0 over an (N,1) score column)
        e = jnp.exp(v - jnp.max(v, axis=0, keepdims=True))
        return e * pl.reciprocal(jnp.sum(e, axis=0, keepdims=True), approx=True)

    A, O, S = N_ACTIONS, N_OBJECTS, N_STATES

    # ---- unpack activations ------------------------------------------------------
    h_vec = x_ref[0:8, 0:NODE_FEAT]                      # (8, 8)
    adj = x_ref[0:8, 8:8 + N_OBJECTS]                    # (8, 8)
    gov = x_ref[8:11, 0:PRETRAINED_VECTOR_SIZE]          # (3, 16)
    goal = x_ref[11:12, 0:SBERT_VECTOR_SIZE]             # (1, 32)
    lstm_in = x_ref[12:13, 0:72]                         # (1, 72) = [pred | h0 | 0]
    c0 = x_ref[13:14, 0:H]                               # (1, 32)
    gum = x_ref[14:16, :]                                # (2, 128) rows fwd / inv

    # ---- embed_adj (sigmoid), embed_sbert (prelu) ---------------------------------
    h_adj = sigmoid(dot(adj, w_ref[R_ADJ:R_ADJ + 8, 0:H]) + w_ref[R_BIAS:R_BIAS + 1, 0:H])
    goal_e = prelu(dot(goal, w_ref[R_SB:R_SB + 32, 0:H]) + w_ref[R_BIAS + 1:R_BIAS + 2, 0:H])

    # ---- graph attention (VPU mul + lane reduce; softmax over nodes) ---------------
    h_cat = jnp.concatenate([h_vec, h_adj], axis=-1)                         # (8, 40)
    w_gh = w_ref[R_ATTN:R_ATTN + 1, 0:NODE_FEAT + H]                         # (1, 40)
    w_gg = w_ref[R_ATTN + 1:R_ATTN + 2, 0:H]                                 # (1, 32)
    goal_term = jnp.sum(goal_e * w_gg, axis=-1, keepdims=True)               # (1, 1)
    scores = jnp.sum(h_cat * w_gh, axis=-1, keepdims=True) + goal_term + b_gattn
    attn = softmax_rows(scores)                                              # (8, 1)
    h_agg = jnp.sum(attn * h_cat, axis=0, keepdims=True)                     # (1, 40)
    h_embed = prelu(dot(h_agg, w_ref[R_GE:R_GE + 40, 0:H])
                    + w_ref[R_BIAS + 3:R_BIAS + 4, 0:H])                     # (1, 32)

    # ---- goal-object attention -----------------------------------------------------
    goe = prelu(dot(gov, w_ref[R_CN:R_CN + 16, 0:H]) + w_ref[R_BIAS + 2:R_BIAS + 3, 0:H])
    w_goh = w_ref[R_ATTN + 2:R_ATTN + 3, 0:H]
    w_goo = w_ref[R_ATTN + 3:R_ATTN + 4, 0:H]
    he_term = jnp.sum(h_embed * w_goh, axis=-1, keepdims=True)               # (1, 1)
    sc2 = jnp.sum(goe * w_goo, axis=-1, keepdims=True) + he_term + b_goattn  # (3, 1)
    goal_obj_embed = jnp.sum(softmax_rows(sc2) * goe, axis=0, keepdims=True)  # (1, 32)

    # ---- single-step LSTM: one (1,72)x(72,128) dot, gate lanes i|f|g|o -------------
    gates = dot(lstm_in, w_ref[R_LSTM:R_LSTM + 72, :]) + w_ref[R_BIAS + 5:R_BIAS + 6, :]
    sg = sigmoid(gates)                                  # one full-vreg EUP pass
    i_g, f_g, o_g = sg[:, 0:H], sg[:, H:2 * H], sg[:, 3 * H:4 * H]
    g_g = jnp.tanh(gates[:, 2 * H:3 * H])
    c1 = f_g * c0 + i_g * g_g                            # (1, 32)
    h1 = o_g * jnp.tanh(c1)                              # (1, 32) = pred_hist

    # ---- fc on cat([h_embed, goal_obj_embed, goal_embed, pred_hist]) (one dot) -----
    fc_in = jnp.concatenate([h_embed, goal_obj_embed, goal_e, h1], axis=-1)   # (1, 128)
    ftd = prelu(dot(fc_in, w_ref[R_FC:R_FC + 128, 0:H])
                + w_ref[R_BIAS + 4:R_BIAS + 5, 0:H])                          # (1, 32)

    # ---- forward / inverse decoders, row-batched (row 0 fwd, row 1 inv) -------------
    inv_tau = 1.0 / GUMBEL_TAU
    rs = jax.lax.broadcasted_iota(jnp.int32, (2, 1), 0).astype(F32)           # [[0],[1]]

    # block-diagonal LHS: row 0 = [ftd | 0], row 1 = [0 | ftd]  -> one MXU pass, both branches
    ftd_b = jnp.broadcast_to(ftd, (2, H))
    ftd2 = jnp.concatenate([ftd_b * (1.0 - rs), ftd_b * rs], axis=-1)          # (2, 64)
    pre = dot(ftd2, w_ref[R_DEC:R_DEC + 64, :]) + w_ref[R_BIAS + 6:R_BIAS + 8, :]  # (2,128)

    act = softmax_lanes(pre[:, 0:A])                                          # (2, 7)
    oh_a = softmax_lanes((act + gum[:, 0:A]) * inv_tau)                       # gumbel_softmax
    oh_a8 = jnp.concatenate([oh_a, jnp.zeros((2, 1), F32)], axis=-1)          # (2, 8)
    lhs_a = jnp.concatenate([oh_a8 * (1.0 - rs), oh_a8 * rs], axis=-1)        # (2, 16)
    comb = pre + dot(lhs_a, w_ref[R_WA:R_WA + 16, :])        # lane-aligned -> full-vreg add

    p1 = softmax_lanes(comb[:, 32:32 + O])                                    # (2, 8)
    oh_p = softmax_lanes((p1 + gum[:, 32:32 + O]) * inv_tau)                  # gumbel_softmax
    lhs_p = jnp.concatenate([oh_p * (1.0 - rs), oh_p * rs], axis=-1)          # (2, 16)
    comb = comb + dot(lhs_p, w_ref[R_WP:R_WP + 16, :])

    p2 = softmax_lanes(comb[:, 64:64 + O])                                    # (2, 8)
    st = softmax_lanes(comb[:, 96:96 + S])                                    # (2, 4)

    # ---- single lane-dense packed output (one full-width store) ---------------------
    def z(rows, w):
        return jnp.zeros((rows, w), F32)
    head_rows = jnp.concatenate(
        [act, z(2, 32 - A), p1, z(2, 32 - O), p2, z(2, 32 - O), st, z(2, 32 - S)],
        axis=-1)                                                              # (2, 128)
    hc_row = jnp.concatenate([h1, c1, z(1, 64)], axis=-1)                     # (1, 128)
    out_ref[...] = jnp.concatenate([head_rows, hc_row, z(1, LANE)], axis=0)   # (4, 128)


# ------------------------------- wrapper ------------------------------------------
def _pack_inputs(h_vec, adj, goal_vec, goal_objs_vec, pred_embed, h0, c0, gumbels):
    x = jnp.zeros((X_ROWS, LANE), F32)
    x = x.at[0:N_NODES, 0:NODE_FEAT].set(h_vec)
    x = x.at[0:N_NODES, 8:8 + N_OBJECTS].set(adj)
    x = x.at[8:8 + N_GOAL_OBJS, 0:PRETRAINED_VECTOR_SIZE].set(goal_objs_vec)
    x = x.at[11:12, 0:SBERT_VECTOR_SIZE].set(goal_vec)
    x = x.at[12:13, 0:LSTM_IN].set(pred_embed)
    x = x.at[12:13, LSTM_IN:LSTM_IN + H].set(h0)
    x = x.at[13:14, 0:H].set(c0)
    x = x.at[14:16, :].set(gumbels)
    return x


@jax.jit
def simple_model_forward(params, h_vec, adj, goal_vec, goal_objs_vec, pred_embed,
                         lstm_h0, lstm_c0, gumbels):
    x_packed = _pack_inputs(h_vec, adj, goal_vec, goal_objs_vec, pred_embed,
                            lstm_h0, lstm_c0, gumbels)
    out = pl.pallas_call(
        simple_model_kernel,
        out_shape=jax.ShapeDtypeStruct((OUT_ROWS, LANE), F32),
        in_specs=[
            pl.BlockSpec(memory_space=pltpu.MemorySpace.SMEM),   # 3 scalars
            pl.BlockSpec(memory_space=pltpu.MemorySpace.VMEM),   # packed activations
            pl.BlockSpec(memory_space=pltpu.MemorySpace.VMEM),   # packed weight slab
        ],
        out_specs=pl.BlockSpec(memory_space=pltpu.MemorySpace.VMEM),
        compiler_params=pltpu.CompilerParams(vmem_limit_bytes=4 << 20),  # tiny footprint
    )(params["scalars"], x_packed, params["w_slab"])

    A, O, S = N_ACTIONS, N_OBJECTS, N_STATES

    def row_heads(r):
        return (out[r, 0:A], out[r, 32:32 + O], out[r, 64:64 + O], out[r, 96:96 + S])

    outputs = row_heads(0) + row_heads(1)          # action, obj1, obj2, state (fwd then inv)
    lstm_hidden = (out[2, 0:H].reshape(1, 1, H), out[2, H:2 * H].reshape(1, 1, H))
    return outputs, lstm_hidden


# ------------------------------- parameter init ------------------------------------
def init_params(key):
    k_slab, _ = jax.random.split(key)
    # One row-stacked (408,128) f32 slab holding every weight & bias at the offsets above.
    # Rows / lanes outside each section's documented extent are never read (or are
    # multiplied by structurally-zero LHS lanes), so a dense random fill is valid.
    w_slab = jax.random.normal(k_slab, (R_TOTAL, LANE), F32) * 0.1
    # [shared nn.PReLU alpha, graph_attn bias, goal_obj_attention bias]
    scalars = jnp.array([0.25, 0.01, -0.01], F32)
    return dict(scalars=scalars, w_slab=w_slab)


def sample_gumbels(key, eps=1e-20):
    # (2,128): row 0 = fwd branch, row 1 = inv branch; action noise @ lanes 0:A,
    # pred1-object noise @ lanes 32:32+O (other lanes zeroed).
    u = jax.random.uniform(key, (2, LANE), F32, minval=0.0, maxval=1.0)
    g = -jnp.log(-jnp.log(u + eps) + eps)
    mask = jnp.zeros((2, LANE), F32)
    mask = mask.at[:, 0:N_ACTIONS].set(1.0).at[:, 32:32 + N_OBJECTS].set(1.0)
    return g * mask


# ----------------------------------- main -------------------------------------------
if __name__ == "__main__":
    key = jax.random.PRNGKey(0)
    k_par, k_hv, k_adj, k_goal, k_gobj, k_pred, k_h0, k_c0, k_g = jax.random.split(key, 9)

    params = init_params(k_par)
    h_vec = jax.random.normal(k_hv, (N_NODES, NODE_FEAT), F32)            # g.ndata['feat']
    adj = (jax.random.uniform(k_adj, (N_NODES, N_OBJECTS)) > 0.5).astype(F32)
    goal_vec = jax.random.normal(k_goal, (1, SBERT_VECTOR_SIZE), F32)     # goalVec
    goal_objs_vec = jax.random.normal(k_gobj, (N_GOAL_OBJS, PRETRAINED_VECTOR_SIZE), F32)
    pred_embed = jax.random.normal(k_pred, (1, LSTM_IN), F32)             # string2embed(pred)
    lstm_h0 = jax.random.normal(k_h0, (1, N_HIDDEN), F32)                 # torch.randn hidden
    lstm_c0 = jax.random.normal(k_c0, (1, N_HIDDEN), F32)
    gumbels = sample_gumbels(k_g)                                         # gumbel noise

    outs, lstm_hidden = simple_model_forward(
        params, h_vec, adj, goal_vec, goal_objs_vec, pred_embed, lstm_h0, lstm_c0, gumbels)
    jax.block_until_ready(outs)
    jax.block_until_ready(lstm_hidden)

    # sanity: every softmax head is a probability vector; lstm state has torch shape (1,1,H)
    for o in outs:
        assert abs(float(jnp.sum(o)) - 1.0) < 1e-2, float(jnp.sum(o))
    assert lstm_hidden[0].shape == (1, 1, N_HIDDEN) and lstm_hidden[1].shape == (1, 1, N_HIDDEN)
    print("KERNEL_OK")
</pallas_src>

<mosaic_0001>
module attributes {stable_mosaic.version = 11 : i64} {
  func.func @simple_model_kernel(%arg0: memref<3xf32, #tpu.memory_space<smem>>, %arg1: memref<16x128xf32, #tpu.memory_space<vmem>>, %arg2: memref<408x128xf32, #tpu.memory_space<vmem>>, %arg3: memref<4x128xf32, #tpu.memory_space<vmem>>) attributes {dimension_semantics = [], scalar_prefetch = 0 : i64, scratch_operands = 0 : i64, tpu.core_type = #tpu.core_type<tc>} {
    %c0 = arith.constant 0 : index
    %0 = memref.load %arg0[%c0] : memref<3xf32, #tpu.memory_space<smem>>
    %c1 = arith.constant 1 : index
    %1 = memref.load %arg0[%c1] : memref<3xf32, #tpu.memory_space<smem>>
    %c2 = arith.constant 2 : index
    %2 = memref.load %arg0[%c2] : memref<3xf32, #tpu.memory_space<smem>>
    %c0_0 = arith.constant 0 : index
    %c0_1 = arith.constant 0 : index
    %3 = vector.load %arg1[%c0_0, %c0_1] : memref<16x128xf32, #tpu.memory_space<vmem>>, vector<8x8xf32>
    %c0_2 = arith.constant 0 : index
    %c8 = arith.constant 8 : index
    %4 = vector.load %arg1[%c0_2, %c8] : memref<16x128xf32, #tpu.memory_space<vmem>>, vector<8x8xf32>
    %c8_3 = arith.constant 8 : index
    %c0_4 = arith.constant 0 : index
    %5 = vector.load %arg1[%c8_3, %c0_4] : memref<16x128xf32, #tpu.memory_space<vmem>>, vector<3x16xf32>
    %c11 = arith.constant 11 : index
    %c0_5 = arith.constant 0 : index
    %6 = vector.load %arg1[%c11, %c0_5] : memref<16x128xf32, #tpu.memory_space<vmem>>, vector<1x32xf32>
    %c12 = arith.constant 12 : index
    %c0_6 = arith.constant 0 : index
    %7 = vector.load %arg1[%c12, %c0_6] : memref<16x128xf32, #tpu.memory_space<vmem>>, vector<1x72xf32>
    %c13 = arith.constant 13 : index
    %c0_7 = arith.constant 0 : index
    %8 = vector.load %arg1[%c13, %c0_7] : memref<16x128xf32, #tpu.memory_space<vmem>>, vector<1x32xf32>
    %c14 = arith.constant 14 : index
    %c0_8 = arith.constant 0 : index
    %9 = vector.load %arg1[%c14, %c0_8] : memref<16x128xf32, #tpu.memory_space<vmem>>, vector<2x128xf32>
    %c0_9 = arith.constant 0 : index
    %c0_10 = arith.constant 0 : index
    %10 = vector.load %arg2[%c0_9, %c0_10] : memref<408x128xf32, #tpu.memory_space<vmem>>, vector<8x32xf32>
    %cst = arith.constant dense<0.000000e+00> : vector<8x32xf32>
    %11 = tpu.matmul %4, %10, %cst {dimension_numbers = #tpu.dot_dimension_numbers<[1], [0], [0], [1], [0, 0, 1, 1], [], []>} : vector<8x8xf32>, vector<8x32xf32>, vector<8x32xf32> -> vector<8x32xf32>
    %c400 = arith.constant 400 : index
    %c0_11 = arith.constant 0 : index
    %12 = vector.load %arg2[%c400, %c0_11] : memref<408x128xf32, #tpu.memory_space<vmem>>, vector<1x32xf32>
    %13 = vector.broadcast %12 : vector<1x32xf32> to vector<8x32xf32>
    %14 = arith.addf %11, %13 : vector<8x32xf32>
    %cst_12 = arith.constant 0.000000e+00 : f32
    %15 = vector.broadcast %cst_12 : f32 to vector<8x32xf32>
    %16 = arith.subf %15, %14 : vector<8x32xf32>
    %17 = math.exp %16 : vector<8x32xf32>
    %cst_13 = arith.constant 1.000000e+00 : f32
    %18 = vector.broadcast %cst_13 : f32 to vector<8x32xf32>
    %19 = arith.addf %18, %17 : vector<8x32xf32>
    %20 = tpu.reciprocal %19 {approx = true} : vector<8x32xf32> -> vector<8x32xf32>
    %c8_14 = arith.constant 8 : index
    %c0_15 = arith.constant 0 : index
    %21 = vector.load %arg2[%c8_14, %c0_15] : memref<408x128xf32, #tpu.memory_space<vmem>>, vector<32x32xf32>
    %cst_16 = arith.constant dense<0.000000e+00> : vector<1x32xf32>
    %22 = tpu.matmul %6, %21, %cst_16 {dimension_numbers = #tpu.dot_dimension_numbers<[1], [0], [0], [1], [0, 0, 1, 1], [], []>} : vector<1x32xf32>, vector<32x32xf32>, vector<1x32xf32> -> vector<1x32xf32>
    %c401 = arith.constant 401 : index
    %c0_17 = arith.constant 0 : index
    %23 = vector.load %arg2[%c401, %c0_17] : memref<408x128xf32, #tpu.memory_space<vmem>>, vector<1x32xf32>
    %24 = arith.addf %22, %23 : vector<1x32xf32>
    %cst_18 = arith.constant 0.000000e+00 : f32
    %25 = vector.broadcast %cst_18 : f32 to vector<1x32xf32>
    %26 = arith.cmpf oge, %24, %25 : vector<1x32xf32>
    %27 = vector.broadcast %0 : f32 to vector<1x32xf32>
    %28 = arith.mulf %27, %24 : vector<1x32xf32>
    %29 = arith.select %26, %24, %28 : vector<1x32xi1>, vector<1x32xf32>
    %30 = tpu.concatenate %3, %20 in 1 : vector<8x8xf32>, vector<8x32xf32> -> vector<8x40xf32>
    %c392 = arith.constant 392 : index
    %c0_19 = arith.constant 0 : index
    %31 = vector.load %arg2[%c392, %c0_19] : memref<408x128xf32, #tpu.memory_space<vmem>>, vector<1x40xf32>
    %c393 = arith.constant 393 : index
    %c0_20 = arith.constant 0 : index
    %32 = vector.load %arg2[%c393, %c0_20] : memref<408x128xf32, #tpu.memory_space<vmem>>, vector<1x32xf32>
    %33 = arith.mulf %29, %32 : vector<1x32xf32>
    %cst_21 = arith.constant dense<0.000000e+00> : vector<1xf32>
    %34 = vector.multi_reduction <add>, %33, %cst_21 [1] : vector<1x32xf32> to vector<1xf32>
    %35 = vector.shape_cast %34 : vector<1xf32> to vector<1x1xf32>
    %36 = vector.broadcast %31 : vector<1x40xf32> to vector<8x40xf32>
    %37 = arith.mulf %30, %36 : vector<8x40xf32>
    %cst_22 = arith.constant dense<0.000000e+00> : vector<8xf32>
    %38 = vector.multi_reduction <add>, %37, %cst_22 [1] : vector<8x40xf32> to vector<8xf32>
    %39 = vector.shape_cast %38 : vector<8xf32> to vector<8x1xf32>
    %40 = vector.broadcast %35 : vector<1x1xf32> to vector<8x1xf32>
    %41 = arith.addf %39, %40 : vector<8x1xf32>
    %42 = vector.broadcast %1 : f32 to vector<8x1xf32>
    %43 = arith.addf %41, %42 : vector<8x1xf32>
    %cst_23 = arith.constant dense<0xFF800000> : vector<1xf32>
    %44 = vector.multi_reduction <maximumf>, %43, %cst_23 [0] : vector<8x1xf32> to vector<1xf32>
    %45 = vector.shape_cast %44 : vector<1xf32> to vector<1x1xf32>
    %46 = vector.broadcast %45 : vector<1x1xf32> to vector<8x1xf32>
    %47 = arith.subf %43, %46 : vector<8x1xf32>
    %48 = math.exp %47 : vector<8x1xf32>
    %cst_24 = arith.constant dense<0.000000e+00> : vector<1xf32>
    %49 = vector.multi_reduction <add>, %48, %cst_24 [0] : vector<8x1xf32> to vector<1xf32>
    %50 = vector.shape_cast %49 : vector<1xf32> to vector<1x1xf32>
    %51 = tpu.reciprocal %50 {approx = true} : vector<1x1xf32> -> vector<1x1xf32>
    %52 = vector.broadcast %51 : vector<1x1xf32> to vector<8x1xf32>
    %53 = arith.mulf %48, %52 : vector<8x1xf32>
    %54 = vector.broadcast %53 : vector<8x1xf32> to vector<8x40xf32>
    %55 = arith.mulf %54, %30 : vector<8x40xf32>
    %cst_25 = arith.constant dense<0.000000e+00> : vector<40xf32>
    %56 = vector.multi_reduction <add>, %55, %cst_25 [0] : vector<8x40xf32> to vector<40xf32>
    %57 = vector.shape_cast %56 : vector<40xf32> to vector<1x40xf32>
    %c56 = arith.constant 56 : index
    %c0_26 = arith.constant 0 : index
    %58 = vector.load %arg2[%c56, %c0_26] : memref<408x128xf32, #tpu.memory_space<vmem>>, vector<40x32xf32>
    %cst_27 = arith.constant dense<0.000000e+00> : vector<1x32xf32>
    %59 = tpu.matmul %57, %58, %cst_27 {dimension_numbers = #tpu.dot_dimension_numbers<[1], [0], [0], [1], [0, 0, 1, 1], [], []>} : vector<1x40xf32>, vector<40x32xf32>, vector<1x32xf32> -> vector<1x32xf32>
    %c403 = arith.constant 403 : index
    %c0_28 = arith.constant 0 : index
    %60 = vector.load %arg2[%c403, %c0_28] : memref<408x128xf32, #tpu.memory_space<vmem>>, vector<1x32xf32>
    %61 = arith.addf %59, %60 : vector<1x32xf32>
    %cst_29 = arith.constant 0.000000e+00 : f32
    %62 = vector.broadcast %cst_29 : f32 to vector<1x32xf32>
    %63 = arith.cmpf oge, %61, %62 : vector<1x32xf32>
    %64 = vector.broadcast %0 : f32 to vector<1x32xf32>
    %65 = arith.mulf %64, %61 : vector<1x32xf32>
    %66 = arith.select %63, %61, %65 : vector<1x32xi1>, vector<1x32xf32>
    %c40 = arith.constant 40 : index
    %c0_30 = arith.constant 0 : index
    %67 = vector.load %arg2[%c40, %c0_30] : memref<408x128xf32, #tpu.memory_space<vmem>>, vector<16x32xf32>
    %cst_31 = arith.constant dense<0.000000e+00> : vector<3x32xf32>
    %68 = tpu.matmul %5, %67, %cst_31 {dimension_numbers = #tpu.dot_dimension_numbers<[1], [0], [0], [1], [0, 0, 1, 1], [], []>} : vector<3x16xf32>, vector<16x32xf32>, vector<3x32xf32> -> vector<3x32xf32>
    %c402 = arith.constant 402 : index
    %c0_32 = arith.constant 0 : index
    %69 = vector.load %arg2[%c402, %c0_32] : memref<408x128xf32, #tpu.memory_space<vmem>>, vector<1x32xf32>
    %70 = vector.broadcast %69 : vector<1x32xf32> to vector<3x32xf32>
    %71 = arith.addf %68, %70 : vector<3x32xf32>
    %cst_33 = arith.constant 0.000000e+00 : f32
    %72 = vector.broadcast %cst_33 : f32 to vector<3x32xf32>
    %73 = arith.cmpf oge, %71, %72 : vector<3x32xf32>
    %74 = vector.broadcast %0 : f32 to vector<3x32xf32>
    %75 = arith.mulf %74, %71 : vector<3x32xf32>
    %76 = arith.select %73, %71, %75 : vector<3x32xi1>, vector<3x32xf32>
    %c394 = arith.constant 394 : index
    %c0_34 = arith.constant 0 : index
    %77 = vector.load %arg2[%c394, %c0_34] : memref<408x128xf32, #tpu.memory_space<vmem>>, vector<1x32xf32>
    %c395 = arith.constant 395 : index
    %c0_35 = arith.constant 0 : index
    %78 = vector.load %arg2[%c395, %c0_35] : memref<408x128xf32, #tpu.memory_space<vmem>>, vector<1x32xf32>
    %79 = arith.mulf %66, %77 : vector<1x32xf32>
    %cst_36 = arith.constant dense<0.000000e+00> : vector<1xf32>
    %80 = vector.multi_reduction <add>, %79, %cst_36 [1] : vector<1x32xf32> to vector<1xf32>
    %81 = vector.shape_cast %80 : vector<1xf32> to vector<1x1xf32>
    %82 = vector.broadcast %78 : vector<1x32xf32> to vector<3x32xf32>
    %83 = arith.mulf %76, %82 : vector<3x32xf32>
    %cst_37 = arith.constant dense<0.000000e+00> : vector<3xf32>
    %84 = vector.multi_reduction <add>, %83, %cst_37 [1] : vector<3x32xf32> to vector<3xf32>
    %85 = vector.shape_cast %84 : vector<3xf32> to vector<3x1xf32>
    %86 = vector.broadcast %81 : vector<1x1xf32> to vector<3x1xf32>
    %87 = arith.addf %85, %86 : vector<3x1xf32>
    %88 = vector.broadcast %2 : f32 to vector<3x1xf32>
    %89 = arith.addf %87, %88 : vector<3x1xf32>
    %cst_38 = arith.constant dense<0xFF800000> : vector<1xf32>
    %90 = vector.multi_reduction <maximumf>, %89, %cst_38 [0] : vector<3x1xf32> to vector<1xf32>
    %91 = vector.shape_cast %90 : vector<1xf32> to vector<1x1xf32>
    %92 = vector.broadcast %91 : vector<1x1xf32> to vector<3x1xf32>
    %93 = arith.subf %89, %92 : vector<3x1xf32>
    %94 = math.exp %93 : vector<3x1xf32>
    %cst_39 = arith.constant dense<0.000000e+00> : vector<1xf32>
    %95 = vector.multi_reduction <add>, %94, %cst_39 [0] : vector<3x1xf32> to vector<1xf32>
    %96 = vector.shape_cast %95 : vector<1xf32> to vector<1x1xf32>
    %97 = tpu.reciprocal %96 {approx = true} : vector<1x1xf32> -> vector<1x1xf32>
    %98 = vector.broadcast %97 : vector<1x1xf32> to vector<3x1xf32>
    %99 = arith.mulf %94, %98 : vector<3x1xf32>
    %100 = vector.broadcast %99 : vector<3x1xf32> to vector<3x32xf32>
    %101 = arith.mulf %100, %76 : vector<3x32xf32>
    %cst_40 = arith.constant dense<0.000000e+00> : vector<32xf32>
    %102 = vector.multi_reduction <add>, %101, %cst_40 [0] : vector<3x32xf32> to vector<32xf32>
    %103 = vector.shape_cast %102 : vector<32xf32> to vector<1x32xf32>
    %c96 = arith.constant 96 : index
    %c0_41 = arith.constant 0 : index
    %104 = vector.load %arg2[%c96, %c0_41] : memref<408x128xf32, #tpu.memory_space<vmem>>, vector<72x128xf32>
    %cst_42 = arith.constant dense<0.000000e+00> : vector<1x128xf32>
    %105 = tpu.matmul %7, %104, %cst_42 {dimension_numbers = #tpu.dot_dimension_numbers<[1], [0], [0], [1], [0, 0, 1, 1], [], []>} : vector<1x72xf32>, vector<72x128xf32>, vector<1x128xf32> -> vector<1x128xf32>
    %c405 = arith.constant 405 : index
    %c0_43 = arith.constant 0 : index
    %106 = vector.load %arg2[%c405, %c0_43] : memref<408x128xf32, #tpu.memory_space<vmem>>, vector<1x128xf32>
    %107 = arith.addf %105, %106 : vector<1x128xf32>
    %cst_44 = arith.constant 0.000000e+00 : f32
    %108 = vector.broadcast %cst_44 : f32 to vector<1x128xf32>
    %109 = arith.subf %108, %107 : vector<1x128xf32>
    %110 = math.exp %109 : vector<1x128xf32>
    %cst_45 = arith.constant 1.000000e+00 : f32
    %111 = vector.broadcast %cst_45 : f32 to vector<1x128xf32>
    %112 = arith.addf %111, %110 : vector<1x128xf32>
    %113 = tpu.reciprocal %112 {approx = true} : vector<1x128xf32> -> vector<1x128xf32>
    %114 = vector.extract_strided_slice %113 {offsets = [0, 0], sizes = [1, 32], strides = [1, 1]} : vector<1x128xf32> to vector<1x32xf32>
    %115 = vector.extract_strided_slice %113 {offsets = [0, 32], sizes = [1, 32], strides = [1, 1]} : vector<1x128xf32> to vector<1x32xf32>
    %116 = vector.extract_strided_slice %113 {offsets = [0, 96], sizes = [1, 32], strides = [1, 1]} : vector<1x128xf32> to vector<1x32xf32>
    %117 = vector.extract_strided_slice %107 {offsets = [0, 64], sizes = [1, 32], strides = [1, 1]} : vector<1x128xf32> to vector<1x32xf32>
    %118 = math.tanh %117 : vector<1x32xf32>
    %119 = arith.mulf %115, %8 : vector<1x32xf32>
    %120 = arith.mulf %114, %118 : vector<1x32xf32>
    %121 = arith.addf %119, %120 : vector<1x32xf32>
    %122 = math.tanh %121 : vector<1x32xf32>
    %123 = arith.mulf %116, %122 : vector<1x32xf32>
    %124 = tpu.concatenate %66, %103, %29, %123 in 1 : vector<1x32xf32>, vector<1x32xf32>, vector<1x32xf32>, vector<1x32xf32> -> vector<1x128xf32>
    %c168 = arith.constant 168 : index
    %c0_46 = arith.constant 0 : index
    %125 = vector.load %arg2[%c168, %c0_46] : memref<408x128xf32, #tpu.memory_space<vmem>>, vector<128x32xf32>
    %cst_47 = arith.constant dense<0.000000e+00> : vector<1x32xf32>
    %126 = tpu.matmul %124, %125, %cst_47 {dimension_numbers = #tpu.dot_dimension_numbers<[1], [0], [0], [1], [0, 0, 1, 1], [], []>} : vector<1x128xf32>, vector<128x32xf32>, vector<1x32xf32> -> vector<1x32xf32>
    %c404 = arith.constant 404 : index
    %c0_48 = arith.constant 0 : index
    %127 = vector.load %arg2[%c404, %c0_48] : memref<408x128xf32, #tpu.memory_space<vmem>>, vector<1x32xf32>
    %128 = arith.addf %126, %127 : vector<1x32xf32>
    %cst_49 = arith.constant 0.000000e+00 : f32
    %129 = vector.broadcast %cst_49 : f32 to vector<1x32xf32>
    %130 = arith.cmpf oge, %128, %129 : vector<1x32xf32>
    %131 = vector.broadcast %0 : f32 to vector<1x32xf32>
    %132 = arith.mulf %131, %128 : vector<1x32xf32>
    %133 = arith.select %130, %128, %132 : vector<1x32xi1>, vector<1x32xf32>
    %134 = tpu.iota {dimensions = array<i32: 0>} : vector<2x1xi32>
    %135 = arith.sitofp %134 : vector<2x1xi32> to vector<2x1xf32>
    %136 = vector.shape_cast %133 : vector<1x32xf32> to vector<1x32xf32>
    %137 = vector.broadcast %136 : vector<1x32xf32> to vector<2x32xf32>
    %cst_50 = arith.constant 1.000000e+00 : f32
    %138 = vector.broadcast %cst_50 : f32 to vector<2x1xf32>
    %139 = arith.subf %138, %135 : vector<2x1xf32>
    %140 = vector.broadcast %139 : vector<2x1xf32> to vector<2x32xf32>
    %141 = arith.mulf %137, %140 : vector<2x32xf32>
    %142 = vector.broadcast %135 : vector<2x1xf32> to vector<2x32xf32>
    %143 = arith.mulf %137, %142 : vector<2x32xf32>
    %144 = tpu.concatenate %141, %143 in 1 : vector<2x32xf32>, vector<2x32xf32> -> vector<2x64xf32>
    %c296 = arith.constant 296 : index
    %c0_51 = arith.constant 0 : index
    %145 = vector.load %arg2[%c296, %c0_51] : memref<408x128xf32, #tpu.memory_space<vmem>>, vector<64x128xf32>
    %cst_52 = arith.constant dense<0.000000e+00> : vector<2x128xf32>
    %146 = tpu.matmul %144, %145, %cst_52 {dimension_numbers = #tpu.dot_dimension_numbers<[1], [0], [0], [1], [0, 0, 1, 1], [], []>} : vector<2x64xf32>, vector<64x128xf32>, vector<2x128xf32> -> vector<2x128xf32>
    %c406 = arith.constant 406 : index
    %c0_53 = arith.constant 0 : index
    %147 = vector.load %arg2[%c406, %c0_53] : memref<408x128xf32, #tpu.memory_space<vmem>>, vector<2x128xf32>
    %148 = arith.addf %146, %147 : vector<2x128xf32>
    %149 = vector.extract_strided_slice %148 {offsets = [0, 0], sizes = [2, 7], strides = [1, 1]} : vector<2x128xf32> to vector<2x7xf32>
    %cst_54 = arith.constant dense<0xFF800000> : vector<2xf32>
    %150 = vector.multi_reduction <maximumf>, %149, %cst_54 [1] : vector<2x7xf32> to vector<2xf32>
    %151 = vector.shape_cast %150 : vector<2xf32> to vector<2x1xf32>
    %152 = vector.broadcast %151 : vector<2x1xf32> to vector<2x7xf32>
    %153 = arith.subf %149, %152 : vector<2x7xf32>
    %154 = math.exp %153 : vector<2x7xf32>
    %cst_55 = arith.constant dense<0.000000e+00> : vector<2xf32>
    %155 = vector.multi_reduction <add>, %154, %cst_55 [1] : vector<2x7xf32> to vector<2xf32>
    %156 = vector.shape_cast %155 : vector<2xf32> to vector<2x1xf32>
    %157 = tpu.reciprocal %156 {approx = true} : vector<2x1xf32> -> vector<2x1xf32>
    %158 = vector.broadcast %157 : vector<2x1xf32> to vector<2x7xf32>
    %159 = arith.mulf %154, %158 : vector<2x7xf32>
    %160 = vector.extract_strided_slice %9 {offsets = [0, 0], sizes = [2, 7], strides = [1, 1]} : vector<2x128xf32> to vector<2x7xf32>
    %161 = arith.addf %159, %160 : vector<2x7xf32>
    %cst_56 = arith.constant 1.000000e+02 : f32
    %162 = vector.broadcast %cst_56 : f32 to vector<2x7xf32>
    %163 = arith.mulf %161, %162 : vector<2x7xf32>
    %cst_57 = arith.constant dense<0xFF800000> : vector<2xf32>
    %164 = vector.multi_reduction <maximumf>, %163, %cst_57 [1] : vector<2x7xf32> to vector<2xf32>
    %165 = vector.shape_cast %164 : vector<2xf32> to vector<2x1xf32>
    %166 = vector.broadcast %165 : vector<2x1xf32> to vector<2x7xf32>
    %167 = arith.subf %163, %166 : vector<2x7xf32>
    %168 = math.exp %167 : vector<2x7xf32>
    %cst_58 = arith.constant dense<0.000000e+00> : vector<2xf32>
    %169 = vector.multi_reduction <add>, %168, %cst_58 [1] : vector<2x7xf32> to vector<2xf32>
    %170 = vector.shape_cast %169 : vector<2xf32> to vector<2x1xf32>
    %171 = tpu.reciprocal %170 {approx = true} : vector<2x1xf32> -> vector<2x1xf32>
    %172 = vector.broadcast %171 : vector<2x1xf32> to vector<2x7xf32>
    %173 = arith.mulf %168, %172 : vector<2x7xf32>
    %cst_59 = arith.constant 0.000000e+00 : f32
    %174 = vector.broadcast %cst_59 : f32 to vector<2x1xf32>
    %175 = tpu.concatenate %173, %174 in 1 : vector<2x7xf32>, vector<2x1xf32> -> vector<2x8xf32>
    %cst_60 = arith.constant 1.000000e+00 : f32
    %176 = vector.broadcast %cst_60 : f32 to vector<2x1xf32>
    %177 = arith.subf %176, %135 : vector<2x1xf32>
    %178 = vector.broadcast %177 : vector<2x1xf32> to vector<2x8xf32>
    %179 = arith.mulf %175, %178 : vector<2x8xf32>
    %180 = vector.broadcast %135 : vector<2x1xf32> to vector<2x8xf32>
    %181 = arith.mulf %175, %180 : vector<2x8xf32>
    %182 = tpu.concatenate %179, %181 in 1 : vector<2x8xf32>, vector<2x8xf32> -> vector<2x16xf32>
    %c360 = arith.constant 360 : index
    %c0_61 = arith.constant 0 : index
    %183 = vector.load %arg2[%c360, %c0_61] : memref<408x128xf32, #tpu.memory_space<vmem>>, vector<16x128xf32>
    %cst_62 = arith.constant dense<0.000000e+00> : vector<2x128xf32>
    %184 = tpu.matmul %182, %183, %cst_62 {dimension_numbers = #tpu.dot_dimension_numbers<[1], [0], [0], [1], [0, 0, 1, 1], [], []>} : vector<2x16xf32>, vector<16x128xf32>, vector<2x128xf32> -> vector<2x128xf32>
    %185 = arith.addf %148, %184 : vector<2x128xf32>
    %186 = vector.extract_strided_slice %185 {offsets = [0, 32], sizes = [2, 8], strides = [1, 1]} : vector<2x128xf32> to vector<2x8xf32>
    %cst_63 = arith.constant dense<0xFF800000> : vector<2xf32>
    %187 = vector.multi_reduction <maximumf>, %186, %cst_63 [1] : vector<2x8xf32> to vector<2xf32>
    %188 = vector.shape_cast %187 : vector<2xf32> to vector<2x1xf32>
    %189 = vector.broadcast %188 : vector<2x1xf32> to vector<2x8xf32>
    %190 = arith.subf %186, %189 : vector<2x8xf32>
    %191 = math.exp %190 : vector<2x8xf32>
    %cst_64 = arith.constant dense<0.000000e+00> : vector<2xf32>
    %192 = vector.multi_reduction <add>, %191, %cst_64 [1] : vector<2x8xf32> to vector<2xf32>
    %193 = vector.shape_cast %192 : vector<2xf32> to vector<2x1xf32>
    %194 = tpu.reciprocal %193 {approx = true} : vector<2x1xf32> -> vector<2x1xf32>
    %195 = vector.broadcast %194 : vector<2x1xf32> to vector<2x8xf32>
    %196 = arith.mulf %191, %195 : vector<2x8xf32>
    %197 = vector.extract_strided_slice %9 {offsets = [0, 32], sizes = [2, 8], strides = [1, 1]} : vector<2x128xf32> to vector<2x8xf32>
    %198 = arith.addf %196, %197 : vector<2x8xf32>
    %cst_65 = arith.constant 1.000000e+02 : f32
    %199 = vector.broadcast %cst_65 : f32 to vector<2x8xf32>
    %200 = arith.mulf %198, %199 : vector<2x8xf32>
    %cst_66 = arith.constant dense<0xFF800000> : vector<2xf32>
    %201 = vector.multi_reduction <maximumf>, %200, %cst_66 [1] : vector<2x8xf32> to vector<2xf32>
    %202 = vector.shape_cast %201 : vector<2xf32> to vector<2x1xf32>
    %203 = vector.broadcast %202 : vector<2x1xf32> to vector<2x8xf32>
    %204 = arith.subf %200, %203 : vector<2x8xf32>
    %205 = math.exp %204 : vector<2x8xf32>
    %cst_67 = arith.constant dense<0.000000e+00> : vector<2xf32>
    %206 = vector.multi_reduction <add>, %205, %cst_67 [1] : vector<2x8xf32> to vector<2xf32>
    %207 = vector.shape_cast %206 : vector<2xf32> to vector<2x1xf32>
    %208 = tpu.reciprocal %207 {approx = true} : vector<2x1xf32> -> vector<2x1xf32>
    %209 = vector.broadcast %208 : vector<2x1xf32> to vector<2x8xf32>
    %210 = arith.mulf %205, %209 : vector<2x8xf32>
    %cst_68 = arith.constant 1.000000e+00 : f32
    %211 = vector.broadcast %cst_68 : f32 to vector<2x1xf32>
    %212 = arith.subf %211, %135 : vector<2x1xf32>
    %213 = vector.broadcast %212 : vector<2x1xf32> to vector<2x8xf32>
    %214 = arith.mulf %210, %213 : vector<2x8xf32>
    %215 = vector.broadcast %135 : vector<2x1xf32> to vector<2x8xf32>
    %216 = arith.mulf %210, %215 : vector<2x8xf32>
    %217 = tpu.concatenate %214, %216 in 1 : vector<2x8xf32>, vector<2x8xf32> -> vector<2x16xf32>
    %c376 = arith.constant 376 : index
    %c0_69 = arith.constant 0 : index
    %218 = vector.load %arg2[%c376, %c0_69] : memref<408x128xf32, #tpu.memory_space<vmem>>, vector<16x128xf32>
    %cst_70 = arith.constant dense<0.000000e+00> : vector<2x128xf32>
    %219 = tpu.matmul %217, %218, %cst_70 {dimension_numbers = #tpu.dot_dimension_numbers<[1], [0], [0], [1], [0, 0, 1, 1], [], []>} : vector<2x16xf32>, vector<16x128xf32>, vector<2x128xf32> -> vector<2x128xf32>
    %220 = arith.addf %185, %219 : vector<2x128xf32>
    %221 = vector.extract_strided_slice %220 {offsets = [0, 64], sizes = [2, 8], strides = [1, 1]} : vector<2x128xf32> to vector<2x8xf32>
    %cst_71 = arith.constant dense<0xFF800000> : vector<2xf32>
    %222 = vector.multi_reduction <maximumf>, %221, %cst_71 [1] : vector<2x8xf32> to vector<2xf32>
    %223 = vector.shape_cast %222 : vector<2xf32> to vector<2x1xf32>
    %224 = vector.broadcast %223 : vector<2x1xf32> to vector<2x8xf32>
    %225 = arith.subf %221, %224 : vector<2x8xf32>
    %226 = math.exp %225 : vector<2x8xf32>
    %cst_72 = arith.constant dense<0.000000e+00> : vector<2xf32>
    %227 = vector.multi_reduction <add>, %226, %cst_72 [1] : vector<2x8xf32> to vector<2xf32>
    %228 = vector.shape_cast %227 : vector<2xf32> to vector<2x1xf32>
    %229 = tpu.reciprocal %228 {approx = true} : vector<2x1xf32> -> vector<2x1xf32>
    %230 = vector.broadcast %229 : vector<2x1xf32> to vector<2x8xf32>
    %231 = arith.mulf %226, %230 : vector<2x8xf32>
    %232 = vector.extract_strided_slice %220 {offsets = [0, 96], sizes = [2, 4], strides = [1, 1]} : vector<2x128xf32> to vector<2x4xf32>
    %cst_73 = arith.constant dense<0xFF800000> : vector<2xf32>
    %233 = vector.multi_reduction <maximumf>, %232, %cst_73 [1] : vector<2x4xf32> to vector<2xf32>
    %234 = vector.shape_cast %233 : vector<2xf32> to vector<2x1xf32>
    %235 = vector.broadcast %234 : vector<2x1xf32> to vector<2x4xf32>
    %236 = arith.subf %232, %235 : vector<2x4xf32>
    %237 = math.exp %236 : vector<2x4xf32>
    %cst_74 = arith.constant dense<0.000000e+00> : vector<2xf32>
    %238 = vector.multi_reduction <add>, %237, %cst_74 [1] : vector<2x4xf32> to vector<2xf32>
    %239 = vector.shape_cast %238 : vector<2xf32> to vector<2x1xf32>
    %240 = tpu.reciprocal %239 {approx = true} : vector<2x1xf32> -> vector<2x1xf32>
    %241 = vector.broadcast %240 : vector<2x1xf32> to vector<2x4xf32>
    %242 = arith.mulf %237, %241 : vector<2x4xf32>
    %cst_75 = arith.constant 0.000000e+00 : f32
    %243 = vector.broadcast %cst_75 : f32 to vector<2x25xf32>
    %cst_76 = arith.constant 0.000000e+00 : f32
    %244 = vector.broadcast %cst_76 : f32 to vector<2x24xf32>
    %cst_77 = arith.constant 0.000000e+00 : f32
    %245 = vector.broadcast %cst_77 : f32 to vector<2x24xf32>
    %cst_78 = arith.constant 0.000000e+00 : f32
    %246 = vector.broadcast %cst_78 : f32 to vector<2x28xf32>
    %247 = tpu.concatenate %159, %243, %196, %244, %231, %245, %242, %246 in 1 : vector<2x7xf32>, vector<2x25xf32>, vector<2x8xf32>, vector<2x24xf32>, vector<2x8xf32>, vector<2x24xf32>, vector<2x4xf32>, vector<2x28xf32> -> vector<2x128xf32>
    %cst_79 = arith.constant 0.000000e+00 : f32
    %248 = vector.broadcast %cst_79 : f32 to vector<1x64xf32>
    %249 = tpu.concatenate %123, %121, %248 in 1 : vector<1x32xf32>, vector<1x32xf32>, vector<1x64xf32> -> vector<1x128xf32>
    %cst_80 = arith.constant 0.000000e+00 : f32
    %250 = vector.broadcast %cst_80 : f32 to vector<1x128xf32>
    %251 = tpu.concatenate %247, %249, %250 in 0 : vector<2x128xf32>, vector<1x128xf32>, vector<1x128xf32> -> vector<4x128xf32>
    %c0_81 = arith.constant 0 : index
    %c0_82 = arith.constant 0 : index
    %252 = vector.load %arg3[%c0_81, %c0_82] : memref<4x128xf32, #tpu.memory_space<vmem>>, vector<4x128xf32>
    tpu.vector_store %arg3[%c0_81, %c0_82], %251 {strides = array<i32>} : memref<4x128xf32, #tpu.memory_space<vmem>>, vector<4x128xf32>,
    return
  }
}

</mosaic_0001>

<llo_original>
// kernel: simple_model_forward.1
$region0: #{simple_model_forward.1}
  #allocation0 [shape = 'u32[]', space=smem, size = 0x4, offset = 0x4, fixed_abs, tag = 'smem constant byte address 0x4 - core index']
  #allocation1 [shape = 'u32[144,128]{1,0:T(1,128)}', space=vmem, size = 0x12000, scoped, tag = 'internal scratch']
  %s0 = inlined_call_operand.vmem [shape: f32[3], index: 0, kind: input, shape index: {}]
  %s1 = inlined_call_operand.vmem [shape: f32[16,128], index: 1, kind: input, shape index: {}]
  %s2 = inlined_call_operand.hbm [shape: f32[408,128], index: 2, kind: input, shape index: {}]
  %s3 = inlined_call_operand.vmem [shape: f32[4,128], index: 3, kind: output, shape index: {}]
  %s4 = sld [smem:[#allocation0]]
  $region30: #{simple_model_forward.1} parent=0
    _
  %s6 = ssub.s32 1, %s4
  %s7 = scalar_select 0, %s6, %s4
  $region1: #{simple_model_forward.1} parent=0
    #allocation2 [shape = 'u8[512]{0}', space=smem, size = 0x200, scoped, tag = 'input window, operand 0, single buffered']
    #allocation3 [shape = 's32[1]{0}', space=sflag, size = 0x4, scoped, tag = 'scoped memory for simple_model_forward.1']
    #allocation4 [shape = 's32[1]{0}', space=sflag, size = 0x4, scoped, tag = 'scoped memory for simple_model_forward.1']
    #allocation5 [shape = 'u8[208896]{0}', space=vmem, size = 0x33000, scoped, tag = 'input window, operand 2, single buffered']
    %8 = vsyncpa [#allocation4], 0
    %9 = vsyncpa [#allocation3], 0
    // Predicated region
    $region2: #{simple_model_forward.1} parent=1 // pred_check
      _
    $region3: #{simple_model_forward.1} parent=1 // pred_check_branch
      %11 = sbr.rel (0) target = $region5
    $region4: #{simple_model_forward.1} parent=1 // pred_region
      %s13 = ssub.s32 16, 16
      %14 = vsyncadd [#allocation4], %s13
      %s16 = sshll.u32 %s0, 4
      %s17 = int_to_ptr.vmem [resolvable:$true] %s16
      %19 = dma.vmem_to_smem %s17, 16, [#allocation2], [#allocation4]
    $region5: #{simple_model_forward.1} parent=1 // pred_fallthru
      _
    // Predicated region
    $region6: #{simple_model_forward.1} parent=1 // pred_check
      _
    $region7: #{simple_model_forward.1} parent=1 // pred_check_branch
      %21 = sbr.rel (0) target = $region9
    $region8: #{simple_model_forward.1} parent=1 // pred_region
      _
    $region9: #{simple_model_forward.1} parent=1 // pred_fallthru
      _
    // Predicated region
    $region10: #{simple_model_forward.1} parent=1 // pred_check
      _
    $region11: #{simple_model_forward.1} parent=1 // pred_check_branch
      %23 = sbr.rel (0) target = $region13
    $region12: #{simple_model_forward.1} parent=1 // pred_region
      %s25 = ssub.s32 6528, 6528
      %26 = vsyncadd [#allocation3], %s25
      %s27 = sshll.u32 [#allocation5], 4
      %s28 = int_to_ptr.vmem [resolvable:$true] %s27
      %33 = dma.hbm_to_vmem [thread:$0]  %s2, 6528, %s28, [#allocation3], 128, 128, 8
    $region13: #{simple_model_forward.1} parent=1 // pred_fallthru
      _
    // Predicated region
    $region14: #{simple_model_forward.1} parent=1 // pred_check
      _
    $region15: #{simple_model_forward.1} parent=1 // pred_check_branch
      %35 = sbr.rel (0) target = $region17
    $region16: #{simple_model_forward.1} parent=1 // pred_region
      %36 = dma.done [#allocation4], 16
    $region17: #{simple_model_forward.1} parent=1 // pred_fallthru
      _
    // Predicated region
    $region18: #{simple_model_forward.1} parent=1 // pred_check
      _
    $region19: #{simple_model_forward.1} parent=1 // pred_check_branch
      %38 = sbr.rel (0) target = $region21
    $region20: #{simple_model_forward.1} parent=1 // pred_region
      %39 = dma.done [#allocation3], 6528
    $region21: #{simple_model_forward.1} parent=1 // pred_fallthru
      _
    %40 = sfence
    %s41 = sld [smem:[#allocation2]]
    %s42 = sld [smem:[#allocation2 + $0x1]]
    %s43 = sld [smem:[#allocation2 + $0x2]]
    %v44 = vld [vmem:[%s1] sm:$0xff]
    %v45 = vld [vmem:[%s1 + $0x8] sm:$0x7]
    %v46 = vld [vmem:[%s1 + $0xb] sm:$0x1]
    %v47 = vld [vmem:[%s1 + $0xc] sm:$0x1]
    %v48 = vld [vmem:[%s1 + $0xd] sm:$0x1]
    %v49 = vld [vmem:[%s1 + $0xe] sm:$0x3]
    %v50 = vld [vmem:[#allocation5] sm:$0xff]
    %v51 = vld [vmem:[#allocation5 + $0x190] sm:$0x1]
    %v52 = vlaneseq
    %v53 = vshrl.u32 %v52, 7
    %v54 = vsub.s32 0, %v53
    %v55 = vrot.slane %v51, %v54
    %57 = vrot.lane.b32.xlu0 %v44, 120
    %v58 = vpop.permute.xlu0 %57
    %vm59 = vcmask 64512
    %v60 = vsel %vm59, %v58, 0
    %62 = vmatprep.subr.mxu0 0.0
    %63 = vmatpush1.msra.mxu0 %v50
    %64 = vmatprep.subr.mxu0 0.0
    %65 = vmatpush1.msra.mxu0 0.0
    %66 = vmatprep.subr.mxu0 0.0
    %67 = vmatpush1.msra.mxu0 0.0
    %68 = vmatprep.subr.mxu0 0.0
    %69 = vmatpush1.msra.mxu0 0.0
    %70 = vmatprep.subr.mxu0 0.0
    %71 = vmatpush1.msra.mxu0 0.0
    %72 = vmatprep.subr.mxu0 0.0
    %73 = vmatpush1.msra.mxu0 0.0
    %74 = vmatprep.subr.mxu0 0.0
    %75 = vmatpush1.msra.mxu0 0.0
    %76 = vmatprep.subr.mxu0 0.0
    %77 = vmatpush1.msra.mxu0 0.0
    %78 = vmatprep.subr.mxu0 0.0
    %79 = vmatpush1.msra.mxu0 0.0
    %80 = vmatprep.subr.mxu0 0.0
    %81 = vmatpush1.msra.mxu0 0.0
    %82 = vmatprep.subr.mxu0 0.0
    %83 = vmatpush1.msra.mxu0 0.0
    %84 = vmatprep.subr.mxu0 0.0
    %85 = vmatpush1.msra.mxu0 0.0
    %86 = vmatprep.subr.mxu0 0.0
    %87 = vmatpush1.msra.mxu0 0.0
    %88 = vmatprep.subr.mxu0 0.0
    %89 = vmatpush1.msra.mxu0 0.0
    %90 = vmatprep.subr.mxu0 0.0
    %91 = vmatpush1.msra.mxu0 0.0
    %92 = vmatprep.subr.mxu0 0.0
    %93 = vmatpush1.msra.mxu0 0.0
    %94 = vmatprep.subr.mxu0 0.0
    %95 = vmatpush1.msra.mxu0 0.0
    %96 = vmatprep.subr.mxu0 0.0
    %97 = vmatpush1.msra.mxu0 0.0
    %98 = vmatprep.subr.mxu0 0.0
    %99 = vmatpush1.msra.mxu0 0.0
    %100 = vmatprep.subr.mxu0 0.0
    %101 = vmatpush1.msra.mxu0 0.0
    %102 = vmatprep.subr.mxu0 0.0
    %103 = vmatpush1.msra.mxu0 0.0
    %104 = vmatprep.subr.mxu0 0.0
    %105 = vmatpush1.msra.mxu0 0.0
    %106 = vmatprep.subr.mxu0 0.0
    %107 = vmatpush1.msra.mxu0 0.0
    %108 = vmatprep.subr.mxu0 0.0
    %109 = vmatpush1.msra.mxu0 0.0
    %110 = vmatprep.subr.mxu0 0.0
    %111 = vmatpush1.msra.mxu0 0.0
    %112 = vmatprep.subr.mxu0 0.0
    %113 = vmatpush1.msra.mxu0 0.0
    %114 = vmatprep.subr.mxu0 0.0
    %115 = vmatpush1.msra.mxu0 0.0
    %116 = vmatprep.subr.mxu0 0.0
    %117 = vmatpush1.msra.mxu0 0.0
    %118 = vmatprep.subr.mxu0 0.0
    %119 = vmatpush1.msra.mxu0 0.0
    %120 = vmatprep.subr.mxu0 0.0
    %121 = vmatpush1.msra.mxu0 0.0
    %122 = vmatprep.subr.mxu0 0.0
    %123 = vmatpush1.msra.mxu0 0.0
    %124 = vmatprep.subr.mxu0 0.0
    %125 = vmatpush1.msra.mxu0 0.0
    %126 = vmatprep.mubr.f32.mxu0 0.0
    %127 = vmatmul.mubr.f32.gmra.mrb[0].mxu0 %v60
    %v128 = vpop.f32.mrb[0].mxu0
    %v129 = vadd.f32 %v55, %v128
    %v130 = vpop.f32.mrb[0].mxu0
    %131 = vdwg.mxu0
    %v132 = vsub.f32 0.0, %v129
    %v133 = vmul.f32 %v132, 1.442695
    %v134 = vpow.pop %v133
    %v135 = vadd.f32 %v134, 1.0
    %v136 = vrcp.pop %v135
    %v137 = vld [vmem:[#allocation5 + $0x8] sm:$0xff]
    %v138 = vld [vmem:[#allocation5 + $0x10] sm:$0xff]
    %v139 = vld [vmem:[#allocation5 + $0x18] sm:$0xff]
    %v140 = vld [vmem:[#allocation5 + $0x20] sm:$0xff]
    %v141 = vld [vmem:[#allocation5 + $0x191] sm:$0x1]
    %vm142 = vcmask 261120
    %v144 = vsel %vm142, %v46, 0
    %146 = vmatprep.subr.mxu0 0.0
    %147 = vmatpush1.msra.mxu0 %v137
    %148 = vmatprep.subr.mxu0 0.0
    %149 = vmatpush1.msra.mxu0 %v138
    %150 = vmatprep.subr.mxu0 0.0
    %151 = vmatpush1.msra.mxu0 %v139
    %152 = vmatprep.subr.mxu0 0.0
    %153 = vmatpush1.msra.mxu0 %v140
    %154 = vmatprep.subr.mxu0 0.0
    %155 = vmatpush1.msra.mxu0 0.0
    %156 = vmatprep.subr.mxu0 0.0
    %157 = vmatpush1.msra.mxu0 0.0
    %158 = vmatprep.subr.mxu0 0.0
    %159 = vmatpush1.msra.mxu0 0.0
    %160 = vmatprep.subr.mxu0 0.0
    %161 = vmatpush1.msra.mxu0 0.0
    %162 = vmatprep.subr.mxu0 0.0
    %163 = vmatpush1.msra.mxu0 0.0
    %164 = vmatprep.subr.mxu0 0.0
    %165 = vmatpush1.msra.mxu0 0.0
    %166 = vmatprep.subr.mxu0 0.0
    %167 = vmatpush1.msra.mxu0 0.0
    %168 = vmatprep.subr.mxu0 0.0
    %169 = vmatpush1.msra.mxu0 0.0
    %170 = vmatprep.subr.mxu0 0.0
    %171 = vmatpush1.msra.mxu0 0.0
    %172 = vmatprep.subr.mxu0 0.0
    %173 = vmatpush1.msra.mxu0 0.0
    %174 = vmatprep.subr.mxu0 0.0
    %175 = vmatpush1.msra.mxu0 0.0
    %176 = vmatprep.subr.mxu0 0.0
    %177 = vmatpush1.msra.mxu0 0.0
    %178 = vmatprep.subr.mxu0 0.0
    %179 = vmatpush1.msra.mxu0 0.0
    %180 = vmatprep.subr.mxu0 0.0
    %181 = vmatpush1.msra.mxu0 0.0
    %182 = vmatprep.subr.mxu0 0.0
    %183 = vmatpush1.msra.mxu0 0.0
    %184 = vmatprep.subr.mxu0 0.0
    %185 = vmatpush1.msra.mxu0 0.0
    %186 = vmatprep.subr.mxu0 0.0
    %187 = vmatpush1.msra.mxu0 0.0
    %188 = vmatprep.subr.mxu0 0.0
    %189 = vmatpush1.msra.mxu0 0.0
    %190 = vmatprep.subr.mxu0 0.0
    %191 = vmatpush1.msra.mxu0 0.0
    %192 = vmatprep.subr.mxu0 0.0
    %193 = vmatpush1.msra.mxu0 0.0
    %194 = vmatprep.subr.mxu0 0.0
    %195 = vmatpush1.msra.mxu0 0.0
    %196 = vmatprep.subr.mxu0 0.0
    %197 = vmatpush1.msra.mxu0 0.0
    %198 = vmatprep.subr.mxu0 0.0
    %199 = vmatpush1.msra.mxu0 0.0
    %200 = vmatprep.subr.mxu0 0.0
    %201 = vmatpush1.msra.mxu0 0.0
    %202 = vmatprep.subr.mxu0 0.0
    %203 = vmatpush1.msra.mxu0 0.0
    %204 = vmatprep.subr.mxu0 0.0
    %205 = vmatpush1.msra.mxu0 0.0
    %206 = vmatprep.subr.mxu0 0.0
    %207 = vmatpush1.msra.mxu0 0.0
    %208 = vmatprep.subr.mxu0 0.0
    %209 = vmatpush1.msra.mxu0 0.0
    %210 = vmatprep.mubr.f32.mxu0 0.0
    %211 = vmatmul.mubr.f32.gmra.mrb[0].mxu0 %v144
    %v212 = vpop.f32.mrb[0].mxu0
    %v213 = vadd.f32 %v141, %v212
    %v214 = vpop.f32.mrb[0].mxu0
    %215 = vdwg.mxu0
    %vm216 = vcmp.ge.f32.partialorder %v213, 0.0
    %v217 = vstv %s41
    %v218 = vmul.f32 %v217, %v213
    %v219 = vsel %vm216, %v213, %v218
    %221 = vrot.lane.b32.xlu0 %v136, 8
    %v222 = vpop.permute.xlu0 %221
    %v224 = vsel %vm59, %v44, %v222
    %v225 = vld [vmem:[#allocation5 + $0x188] sm:$0x1]
    %v226 = vld [vmem:[#allocation5 + $0x189] sm:$0x1]
    %v227 = vmul.f32 %v219, %v226
    %vm228 = vcmask 253952
    %v229 = vsel %vm228, %v227, 0.0
    %230 = vadd.xlane.f32.xlu0 %v229
    %v231 = vpop.xlane.xlu0 %230
    %v232 = vlaneseq
    %v233 = vshrl.u32 %v232, 7
    %v234 = vsub.s32 0, %v233
    %v235 = vrot.slane %v225, %v234
    %v236 = vmul.f32 %v224, %v235
    %vm237 = vcmask 326656
    %v238 = vsel %vm237, %v236, 0.0
    %239 = vadd.xlane.f32.xlu0 %v238
    %v240 = vpop.xlane.xlu0 %239
    %v241 = vlaneseq
    %v242 = vshrl.u32 %v241, 7
    %v243 = vsub.s32 0, %v242
    %v244 = vrot.slane %v231, %v243
    %v245 = vadd.f32 %v240, %v244
    %v246 = vstv %s42
    %v247 = vadd.f32 %v245, %v246
    %v248 = vrot.slane %v247, 4
    %v249 = vmax.f32 %v247, %v248
    %v250 = vrot.slane %v249, 2
    %v251 = vmax.f32 %v249, %v250
    %v252 = vrot.slane %v251, 1
    %v253 = vmax.f32 %v251, %v252
    %v254 = vsub.f32 %v247, %v253
    %v255 = vmul.f32 %v254, 1.442695
    %v256 = vpow.pop %v255
    %v257 = vrot.slane %v256, 4
    %v258 = vadd.f32 %v256, %v257
    %v259 = vrot.slane %v258, 2
    %v260 = vadd.f32 %v258, %v259
    %v261 = vrot.slane %v260, 1
    %v262 = vadd.f32 %v260, %v261
    %v263 = vrcp.pop %v262
    %v264 = vmul.f32 %v256, %v263
    %v265 = vmul.f32 %v264, %v224
    %v266 = vsel %vm237, %v265, 0.0
    %v267 = vrot.slane %v266, 4
    %v268 = vadd.f32 %v266, %v267
    %v269 = vrot.slane %v268, 2
    %v270 = vadd.f32 %v268, %v269
    %v271 = vrot.slane %v270, 1
    %v272 = vadd.f32 %v270, %v271
    %v273 = vld [vmem:[#allocation5 + $0x38] sm:$0xff]
    %v274 = vld [vmem:[#allocation5 + $0x40] sm:$0xff]
    %v275 = vld [vmem:[#allocation5 + $0x48] sm:$0xff]
    %v276 = vld [vmem:[#allocation5 + $0x50] sm:$0xff]
    %v277 = vld [vmem:[#allocation5 + $0x58] sm:$0xff]
    %v278 = vld [vmem:[#allocation5 + $0x193] sm:$0x1]
    %v280 = vsel %vm237, %v272, 0
    %282 = vmatprep.subr.mxu0 0.0
    %283 = vmatpush1.msra.mxu0 %v273
    %284 = vmatprep.subr.mxu0 0.0
    %285 = vmatpush1.msra.mxu0 %v274
    %286 = vmatprep.subr.mxu0 0.0
    %287 = vmatpush1.msra.mxu0 %v275
    %288 = vmatprep.subr.mxu0 0.0
    %289 = vmatpush1.msra.mxu0 %v276
    %290 = vmatprep.subr.mxu0 0.0
    %291 = vmatpush1.msra.mxu0 %v277
    %292 = vmatprep.subr.mxu0 0.0
    %293 = vmatpush1.msra.mxu0 0.0
    %294 = vmatprep.subr.mxu0 0.0
    %295 = vmatpush1.msra.mxu0 0.0
    %296 = vmatprep.subr.mxu0 0.0
    %297 = vmatpush1.msra.mxu0 0.0
    %298 = vmatprep.subr.mxu0 0.0
    %299 = vmatpush1.msra.mxu0 0.0
    %300 = vmatprep.subr.mxu0 0.0
    %301 = vmatpush1.msra.mxu0 0.0
    %302 = vmatprep.subr.mxu0 0.0
    %303 = vmatpush1.msra.mxu0 0.0
    %304 = vmatprep.subr.mxu0 0.0
    %305 = vmatpush1.msra.mxu0 0.0
    %306 = vmatprep.subr.mxu0 0.0
    %307 = vmatpush1.msra.mxu0 0.0
    %308 = vmatprep.subr.mxu0 0.0
    %309 = vmatpush1.msra.mxu0 0.0
    %310 = vmatprep.subr.mxu0 0.0
    %311 = vmatpush1.msra.mxu0 0.0
    %312 = vmatprep.subr.mxu0 0.0
    %313 = vmatpush1.msra.mxu0 0.0
    %314 = vmatprep.subr.mxu0 0.0
    %315 = vmatpush1.msra.mxu0 0.0
    %316 = vmatprep.subr.mxu0 0.0
    %317 = vmatpush1.msra.mxu0 0.0
    %318 = vmatprep.subr.mxu0 0.0
    %319 = vmatpush1.msra.mxu0 0.0
    %320 = vmatprep.subr.mxu0 0.0
    %321 = vmatpush1.msra.mxu0 0.0
    %322 = vmatprep.subr.mxu0 0.0
    %323 = vmatpush1.msra.mxu0 0.0
    %324 = vmatprep.subr.mxu0 0.0
    %325 = vmatpush1.msra.mxu0 0.0
    %326 = vmatprep.subr.mxu0 0.0
    %327 = vmatpush1.msra.mxu0 0.0
    %328 = vmatprep.subr.mxu0 0.0
    %329 = vmatpush1.msra.mxu0 0.0
    %330 = vmatprep.subr.mxu0 0.0
    %331 = vmatpush1.msra.mxu0 0.0
    %332 = vmatprep.subr.mxu0 0.0
    %333 = vmatpush1.msra.mxu0 0.0
    %334 = vmatprep.subr.mxu0 0.0
    %335 = vmatpush1.msra.mxu0 0.0
    %336 = vmatprep.subr.mxu0 0.0
    %337 = vmatpush1.msra.mxu0 0.0
    %338 = vmatprep.subr.mxu0 0.0
    %339 = vmatpush1.msra.mxu0 0.0
    %340 = vmatprep.subr.mxu0 0.0
    %341 = vmatpush1.msra.mxu0 0.0
    %342 = vmatprep.subr.mxu0 0.0
    %343 = vmatpush1.msra.mxu0 0.0
    %344 = vmatprep.subr.mxu0 0.0
    %345 = vmatpush1.msra.mxu0 0.0
    %346 = vmatprep.mubr.f32.mxu0 0.0
    %347 = vmatmul.mubr.f32.gmra.mrb[0].mxu0 %v280
    %v348 = vpop.f32.mrb[0].mxu0
    %v349 = vadd.f32 %v278, %v348
    %v350 = vpop.f32.mrb[0].mxu0
    %351 = vdwg.mxu0
    %vm352 = vcmp.ge.f32.partialorder %v349, 0.0
    %v353 = vmul.f32 %v217, %v349
    %v354 = vsel %vm352, %v349, %v353
    %v355 = vld [vmem:[#allocation5 + $0x28] sm:$0xff]
    %v356 = vld [vmem:[#allocation5 + $0x30] sm:$0xff]
    %v357 = vld [vmem:[#allocation5 + $0x192] sm:$0x1]
    %v358 = vlaneseq
    %v359 = vshrl.u32 %v358, 7
    %v360 = vsub.s32 0, %v359
    %v361 = vrot.slane %v357, %v360
    %vm362 = vcmask 130048
    %v364 = vsel %vm362, %v45, 0
    %366 = vmatprep.subr.mxu0 0.0
    %367 = vmatpush1.msra.mxu0 %v355
    %368 = vmatprep.subr.mxu0 0.0
    %369 = vmatpush1.msra.mxu0 %v356
    %370 = vmatprep.subr.mxu0 0.0
    %371 = vmatpush1.msra.mxu0 0.0
    %372 = vmatprep.subr.mxu0 0.0
    %373 = vmatpush1.msra.mxu0 0.0
    %374 = vmatprep.subr.mxu0 0.0
    %375 = vmatpush1.msra.mxu0 0.0
    %376 = vmatprep.subr.mxu0 0.0
    %377 = vmatpush1.msra.mxu0 0.0
    %378 = vmatprep.subr.mxu0 0.0
    %379 = vmatpush1.msra.mxu0 0.0
    %380 = vmatprep.subr.mxu0 0.0
    %381 = vmatpush1.msra.mxu0 0.0
    %382 = vmatprep.subr.mxu0 0.0
    %383 = vmatpush1.msra.mxu0 0.0
    %384 = vmatprep.subr.mxu0 0.0
    %385 = vmatpush1.msra.mxu0 0.0
    %386 = vmatprep.subr.mxu0 0.0
    %387 = vmatpush1.msra.mxu0 0.0
    %388 = vmatprep.subr.mxu0 0.0
    %389 = vmatpush1.msra.mxu0 0.0
    %390 = vmatprep.subr.mxu0 0.0
    %391 = vmatpush1.msra.mxu0 0.0
    %392 = vmatprep.subr.mxu0 0.0
    %393 = vmatpush1.msra.mxu0 0.0
    %394 = vmatprep.subr.mxu0 0.0
    %395 = vmatpush1.msra.mxu0 0.0
    %396 = vmatprep.subr.mxu0 0.0
    %397 = vmatpush1.msra.mxu0 0.0
    %398 = vmatprep.subr.mxu0 0.0
    %399 = vmatpush1.msra.mxu0 0.0
    %400 = vmatprep.subr.mxu0 0.0
    %401 = vmatpush1.msra.mxu0 0.0
    %402 = vmatprep.subr.mxu0 0.0
    %403 = vmatpush1.msra.mxu0 0.0
    %404 = vmatprep.subr.mxu0 0.0
    %405 = vmatpush1.msra.mxu0 0.0
    %406 = vmatprep.subr.mxu0 0.0
    %407 = vmatpush1.msra.mxu0 0.0
    %408 = vmatprep.subr.mxu0 0.0
    %409 = vmatpush1.msra.mxu0 0.0
    %410 = vmatprep.subr.mxu0 0.0
    %411 = vmatpush1.msra.mxu0 0.0
    %412 = vmatprep.subr.mxu0 0.0
    %413 = vmatpush1.msra.mxu0 0.0
    %414 = vmatprep.subr.mxu0 0.0
    %415 = vmatpush1.msra.mxu0 0.0
    %416 = vmatprep.subr.mxu0 0.0
    %417 = vmatpush1.msra.mxu0 0.0
    %418 = vmatprep.subr.mxu0 0.0
    %419 = vmatpush1.msra.mxu0 0.0
    %420 = vmatprep.subr.mxu0 0.0
    %421 = vmatpush1.msra.mxu0 0.0
    %422 = vmatprep.subr.mxu0 0.0
    %423 = vmatpush1.msra.mxu0 0.0
    %424 = vmatprep.subr.mxu0 0.0
    %425 = vmatpush1.msra.mxu0 0.0
    %426 = vmatprep.subr.mxu0 0.0
    %427 = vmatpush1.msra.mxu0 0.0
    %428 = vmatprep.subr.mxu0 0.0
    %429 = vmatpush1.msra.mxu0 0.0
    %430 = vmatprep.mubr.f32.mxu0 0.0
    %431 = vmatmul.mubr.f32.gmra.mrb[0].mxu0 %v364
    %v432 = vpop.f32.mrb[0].mxu0
    %v433 = vadd.f32 %v361, %v432
    %v434 = vpop.f32.mrb[0].mxu0
    %435 = vdwg.mxu0
    %vm436 = vcmp.ge.f32.partialorder %v433, 0.0
    %v437 = vmul.f32 %v217, %v433
    %v438 = vsel %vm436, %v433, %v437
    %v439 = vld [vmem:[#allocation5 + $0x18a] sm:$0x1]
    %v440 = vld [vmem:[#allocation5 + $0x18b] sm:$0x1]
    %v441 = vmul.f32 %v354, %v439
    %v442 = vsel %vm228, %v441, 0.0
    %443 = vadd.xlane.f32.xlu0 %v442
    %v444 = vpop.xlane.xlu0 %443
    %v445 = vlaneseq
    %v446 = vshrl.u32 %v445, 7
    %v447 = vsub.s32 0, %v446
    %v448 = vrot.slane %v440, %v447
    %v449 = vmul.f32 %v438, %v448
    %vm450 = vcmask 256000
    %v451 = vsel %vm450, %v449, 0.0
    %452 = vadd.xlane.f32.xlu0 %v451
    %v453 = vpop.xlane.xlu0 %452
    %v454 = vlaneseq
    %v455 = vshrl.u32 %v454, 7
    %v456 = vsub.s32 0, %v455
    %v457 = vrot.slane %v444, %v456
    %v458 = vadd.f32 %v453, %v457
    %v459 = vstv %s43
    %v460 = vadd.f32 %v458, %v459
    %vm461 = vcmask 1042432
    %v462 = vsel %vm461, %v460, -inf
    %v463 = vrot.slane %v462, 4
    %v464 = vmax.f32 %v462, %v463
    %v465 = vrot.slane %v464, 2
    %v466 = vmax.f32 %v464, %v465
    %v467 = vrot.slane %v466, 1
    %v468 = vmax.f32 %v466, %v467
    %v469 = vsub.f32 %v460, %v468
    %v470 = vmul.f32 %v469, 1.442695
    %v471 = vpow.pop %v470
    %v472 = vsel %vm461, %v471, 0.0
    %v473 = vrot.slane %v472, 4
    %v474 = vadd.f32 %v472, %v473
    %v475 = vrot.slane %v474, 2
    %v476 = vadd.f32 %v474, %v475
    %v477 = vrot.slane %v476, 1
    %v478 = vadd.f32 %v476, %v477
    %v479 = vrcp.pop %v478
    %v480 = vmul.f32 %v471, %v479
    %v481 = vmul.f32 %v480, %v438
    %v482 = vsel %vm450, %v481, 0.0
    %v483 = vrot.slane %v482, 4
    %v484 = vadd.f32 %v482, %v483
    %v485 = vrot.slane %v484, 2
    %v486 = vadd.f32 %v484, %v485
    %v487 = vrot.slane %v486, 1
    %v488 = vadd.f32 %v486, %v487
    %v489 = vld [vmem:[#allocation5 + $0x60] sm:$0xff]
    %v490 = vld [vmem:[#allocation5 + $0x68] sm:$0xff]
    %v491 = vld [vmem:[#allocation5 + $0x70] sm:$0xff]
    %v492 = vld [vmem:[#allocation5 + $0x78] sm:$0xff]
    %v493 = vld [vmem:[#allocation5 + $0x80] sm:$0xff]
    %v494 = vld [vmem:[#allocation5 + $0x88] sm:$0xff]
    %v495 = vld [vmem:[#allocation5 + $0x90] sm:$0xff]
    %v496 = vld [vmem:[#allocation5 + $0x98] sm:$0xff]
    %v497 = vld [vmem:[#allocation5 + $0xa0] sm:$0xff]
    %v498 = vld [vmem:[#allocation5 + $0x195] sm:$0x1]
    %vm499 = vcmask 588800
    %v501 = vsel %vm499, %v47, 0
    %503 = vmatprep.subr.mxu0 0.0
    %504 = vmatpush1.msra.mxu0 %v489
    %505 = vmatprep.subr.mxu0 0.0
    %506 = vmatpush1.msra.mxu0 %v490
    %507 = vmatprep.subr.mxu0 0.0
    %508 = vmatpush1.msra.mxu0 %v491
    %509 = vmatprep.subr.mxu0 0.0
    %510 = vmatpush1.msra.mxu0 %v492
    %511 = vmatprep.subr.mxu0 0.0
    %512 = vmatpush1.msra.mxu0 %v493
    %513 = vmatprep.subr.mxu0 0.0
    %514 = vmatpush1.msra.mxu0 %v494
    %515 = vmatprep.subr.mxu0 0.0
    %516 = vmatpush1.msra.mxu0 %v495
    %517 = vmatprep.subr.mxu0 0.0
    %518 = vmatpush1.msra.mxu0 %v496
    %519 = vmatprep.subr.mxu0 0.0
    %520 = vmatpush1.msra.mxu0 %v497
    %521 = vmatprep.subr.mxu0 0.0
    %522 = vmatpush1.msra.mxu0 0.0
    %523 = vmatprep.subr.mxu0 0.0
    %524 = vmatpush1.msra.mxu0 0.0
    %525 = vmatprep.subr.mxu0 0.0
    %526 = vmatpush1.msra.mxu0 0.0
    %527 = vmatprep.subr.mxu0 0.0
    %528 = vmatpush1.msra.mxu0 0.0
    %529 = vmatprep.subr.mxu0 0.0
    %530 = vmatpush1.msra.mxu0 0.0
    %531 = vmatprep.subr.mxu0 0.0
    %532 = vmatpush1.msra.mxu0 0.0
    %533 = vmatprep.subr.mxu0 0.0
    %534 = vmatpush1.msra.mxu0 0.0
    %535 = vmatprep.subr.mxu0 0.0
    %536 = vmatpush1.msra.mxu0 0.0
    %537 = vmatprep.subr.mxu0 0.0
    %538 = vmatpush1.msra.mxu0 0.0
    %539 = vmatprep.subr.mxu0 0.0
    %540 = vmatpush1.msra.mxu0 0.0
    %541 = vmatprep.subr.mxu0 0.0
    %542 = vmatpush1.msra.mxu0 0.0
    %543 = vmatprep.subr.mxu0 0.0
    %544 = vmatpush1.msra.mxu0 0.0
    %545 = vmatprep.subr.mxu0 0.0
    %546 = vmatpush1.msra.mxu0 0.0
    %547 = vmatprep.subr.mxu0 0.0
    %548 = vmatpush1.msra.mxu0 0.0
    %549 = vmatprep.subr.mxu0 0.0
    %550 = vmatpush1.msra.mxu0 0.0
    %551 = vmatprep.subr.mxu0 0.0
    %552 = vmatpush1.msra.mxu0 0.0
    %553 = vmatprep.subr.mxu0 0.0
    %554 = vmatpush1.msra.mxu0 0.0
    %555 = vmatprep.subr.mxu0 0.0
    %556 = vmatpush1.msra.mxu0 0.0
    %557 = vmatprep.subr.mxu0 0.0
    %558 = vmatpush1.msra.mxu0 0.0
    %559 = vmatprep.subr.mxu0 0.0
    %560 = vmatpush1.msra.mxu0 0.0
    %561 = vmatprep.subr.mxu0 0.0
    %562 = vmatpush1.msra.mxu0 0.0
    %563 = vmatprep.subr.mxu0 0.0
    %564 = vmatpush1.msra.mxu0 0.0
    %565 = vmatprep.subr.mxu0 0.0
    %566 = vmatpush1.msra.mxu0 0.0
    %567 = vmatprep.mubr.f32.mxu0 0.0
    %568 = vmatmul.mubr.f32.gmra.mrb[0].mxu0 %v501
    %v569 = vpop.f32.mrb[0].mxu0
    %v570 = vadd.f32 %v498, %v569
    %v571 = vpop.f32.mrb[0].mxu0
    %572 = vdwg.mxu0
    %v573 = vsub.f32 0.0, %v570
    %v574 = vmul.f32 %v573, 1.442695
    %v575 = vpow.pop %v574
    %v576 = vadd.f32 %v575, 1.0
    %v577 = vrcp.pop %v576
    %v578 = vtanh.pop %v570
    %580 = vrot.lane.b32.xlu0 %v48, 32
    %v581 = vpop.permute.xlu0 %580
    %v583 = vmul.f32 %v577, %v581
    %585 = vrot.lane.b32.xlu0 %v578, 64
    %v586 = vpop.permute.xlu0 %585
    %v588 = vmul.f32 %v577, %v586
    %590 = vrot.lane.b32.xlu0 %v588, 32
    %v591 = vpop.permute.xlu0 %590
    %v593 = vadd.f32 %v583, %v591
    %v594 = vtanh.pop %v593
    %596 = vrot.lane.b32.xlu0 %v594, 64
    %v597 = vpop.permute.xlu0 %596
    %v599 = vmul.f32 %v577, %v597
    %601 = vrot.lane.b32.xlu0 %v488, 32
    %v602 = vpop.permute.xlu0 %601
    %605 = vrot.lane.b32.xlu0 %v219, 64
    %v606 = vpop.permute.xlu0 %605
    %v608 = vsel %vm142, %v354, %v602
    %vm609 = vcmask 523264
    %v610 = vsel %vm609, %v608, %v606
    %vm611 = vcmask 785408
    %v612 = vsel %vm611, %v610, %v599
    %v613 = vld [vmem:[#allocation5 + $0xa8] sm:$0xff]
    %v614 = vld [vmem:[#allocation5 + $0xb0] sm:$0xff]
    %v615 = vld [vmem:[#allocation5 + $0xb8] sm:$0xff]
    %v616 = vld [vmem:[#allocation5 + $0xc0] sm:$0xff]
    %v617 = vld [vmem:[#allocation5 + $0xc8] sm:$0xff]
    %v618 = vld [vmem:[#allocation5 + $0xd0] sm:$0xff]
    %v619 = vld [vmem:[#allocation5 + $0xd8] sm:$0xff]
    %v620 = vld [vmem:[#allocation5 + $0xe0] sm:$0xff]
    %v621 = vld [vmem:[#allocation5 + $0xe8] sm:$0xff]
    %v622 = vld [vmem:[#allocation5 + $0xf0] sm:$0xff]
    %v623 = vld [vmem:[#allocation5 + $0xf8] sm:$0xff]
    %v624 = vld [vmem:[#allocation5 + $0x100] sm:$0xff]
    %v625 = vld [vmem:[#allocation5 + $0x108] sm:$0xff]
    %v626 = vld [vmem:[#allocation5 + $0x110] sm:$0xff]
    %v627 = vld [vmem:[#allocation5 + $0x118] sm:$0xff]
    %v628 = vld [vmem:[#allocation5 + $0x120] sm:$0xff]
    %v629 = vld [vmem:[#allocation5 + $0x194] sm:$0x1]
    %630 = vmatprep.subr.mxu0 0.0
    %631 = vmatpush1.msra.mxu0 %v613
    %632 = vmatprep.subr.mxu0 0.0
    %633 = vmatpush1.msra.mxu0 %v614
    %634 = vmatprep.subr.mxu0 0.0
    %635 = vmatpush1.msra.mxu0 %v615
    %636 = vmatprep.subr.mxu0 0.0
    %637 = vmatpush1.msra.mxu0 %v616
    %638 = vmatprep.subr.mxu0 0.0
    %639 = vmatpush1.msra.mxu0 %v617
    %640 = vmatprep.subr.mxu0 0.0
    %641 = vmatpush1.msra.mxu0 %v618
    %642 = vmatprep.subr.mxu0 0.0
    %643 = vmatpush1.msra.mxu0 %v619
    %644 = vmatprep.subr.mxu0 0.0
    %645 = vmatpush1.msra.mxu0 %v620
    %646 = vmatprep.subr.mxu0 0.0
    %647 = vmatpush1.msra.mxu0 %v621
    %648 = vmatprep.subr.mxu0 0.0
    %649 = vmatpush1.msra.mxu0 %v622
    %650 = vmatprep.subr.mxu0 0.0
    %651 = vmatpush1.msra.mxu0 %v623
    %652 = vmatprep.subr.mxu0 0.0
    %653 = vmatpush1.msra.mxu0 %v624
    %654 = vmatprep.subr.mxu0 0.0
    %655 = vmatpush1.msra.mxu0 %v625
    %656 = vmatprep.subr.mxu0 0.0
    %657 = vmatpush1.msra.mxu0 %v626
    %658 = vmatprep.subr.mxu0 0.0
    %659 = vmatpush1.msra.mxu0 %v627
    %660 = vmatprep.subr.mxu0 0.0
    %661 = vmatpush1.msra.mxu0 %v628
    %662 = vmatprep.subr.mxu0 0.0
    %663 = vmatpush1.msra.mxu0 0.0
    %664 = vmatprep.subr.mxu0 0.0
    %665 = vmatpush1.msra.mxu0 0.0
    %666 = vmatprep.subr.mxu0 0.0
    %667 = vmatpush1.msra.mxu0 0.0
    %668 = vmatprep.subr.mxu0 0.0
    %669 = vmatpush1.msra.mxu0 0.0
    %670 = vmatprep.subr.mxu0 0.0
    %671 = vmatpush1.msra.mxu0 0.0
    %672 = vmatprep.subr.mxu0 0.0
    %673 = vmatpush1.msra.mxu0 0.0
    %674 = vmatprep.subr.mxu0 0.0
    %675 = vmatpush1.msra.mxu0 0.0
    %676 = vmatprep.subr.mxu0 0.0
    %677 = vmatpush1.msra.mxu0 0.0
    %678 = vmatprep.subr.mxu0 0.0
    %679 = vmatpush1.msra.mxu0 0.0
    %680 = vmatprep.subr.mxu0 0.0
    %681 = vmatpush1.msra.mxu0 0.0
    %682 = vmatprep.subr.mxu0 0.0
    %683 = vmatpush1.msra.mxu0 0.0
    %684 = vmatprep.subr.mxu0 0.0
    %685 = vmatpush1.msra.mxu0 0.0
    %686 = vmatprep.subr.mxu0 0.0
    %687 = vmatpush1.msra.mxu0 0.0
    %688 = vmatprep.subr.mxu0 0.0
    %689 = vmatpush1.msra.mxu0 0.0
    %690 = vmatprep.subr.mxu0 0.0
    %691 = vmatpush1.msra.mxu0 0.0
    %692 = vmatprep.subr.mxu0 0.0
    %693 = vmatpush1.msra.mxu0 0.0
    %694 = vmatprep.mubr.f32.mxu0 0.0
    %695 = vmatmul.mubr.f32.gmra.mrb[0].mxu0 %v612
    %v696 = vpop.f32.mrb[0].mxu0
    %v697 = vadd.f32 %v629, %v696
    %v698 = vpop.f32.mrb[0].mxu0
    %699 = vdwg.mxu0
    %vm700 = vcmp.ge.f32.partialorder %v697, 0.0
    %v701 = vmul.f32 %v217, %v697
    %v702 = vsel %vm700, %v697, %v701
    %v703 = vlaneseq
    %v704 = vshrl.u32 %v703, 7
    %v705 = vcvt.s32.f32 %v704
    %v706 = vlaneseq
    %v707 = vshrl.u32 %v706, 7
    %v708 = vsub.s32 0, %v707
    %v709 = vrot.slane %v702, %v708
    %v710 = vsub.f32 1.0, %v705
    %v711 = vmul.f32 %v709, %v710
    %v712 = vmul.f32 %v709, %v705
    %714 = vrot.lane.b32.xlu0 %v712, 32
    %v715 = vpop.permute.xlu0 %714
    %v717 = vsel %vm142, %v711, %v715
    %v718 = vld [vmem:[#allocation5 + $0x128] sm:$0xff]
    %v719 = vld [vmem:[#allocation5 + $0x130] sm:$0xff]
    %v720 = vld [vmem:[#allocation5 + $0x138] sm:$0xff]
    %v721 = vld [vmem:[#allocation5 + $0x140] sm:$0xff]
    %v722 = vld [vmem:[#allocation5 + $0x148] sm:$0xff]
    %v723 = vld [vmem:[#allocation5 + $0x150] sm:$0xff]
    %v724 = vld [vmem:[#allocation5 + $0x158] sm:$0xff]
    %v725 = vld [vmem:[#allocation5 + $0x160] sm:$0xff]
    %v726 = vld [vmem:[#allocation5 + $0x196] sm:$0x3]
    %v728 = vsel %vm609, %v717, 0
    %730 = vmatprep.subr.mxu0 0.0
    %731 = vmatpush1.msra.mxu0 %v718
    %732 = vmatprep.subr.mxu0 0.0
    %733 = vmatpush1.msra.mxu0 %v719
    %734 = vmatprep.subr.mxu0 0.0
    %735 = vmatpush1.msra.mxu0 %v720
    %736 = vmatprep.subr.mxu0 0.0
    %737 = vmatpush1.msra.mxu0 %v721
    %738 = vmatprep.subr.mxu0 0.0
    %739 = vmatpush1.msra.mxu0 %v722
    %740 = vmatprep.subr.mxu0 0.0
    %741 = vmatpush1.msra.mxu0 %v723
    %742 = vmatprep.subr.mxu0 0.0
    %743 = vmatpush1.msra.mxu0 %v724
    %744 = vmatprep.subr.mxu0 0.0
    %745 = vmatpush1.msra.mxu0 %v725
    %746 = vmatprep.subr.mxu0 0.0
    %747 = vmatpush1.msra.mxu0 0.0
    %748 = vmatprep.subr.mxu0 0.0
    %749 = vmatpush1.msra.mxu0 0.0
    %750 = vmatprep.subr.mxu0 0.0
    %751 = vmatpush1.msra.mxu0 0.0
    %752 = vmatprep.subr.mxu0 0.0
    %753 = vmatpush1.msra.mxu0 0.0
    %754 = vmatprep.subr.mxu0 0.0
    %755 = vmatpush1.msra.mxu0 0.0
    %756 = vmatprep.subr.mxu0 0.0
    %757 = vmatpush1.msra.mxu0 0.0
    %758 = vmatprep.subr.mxu0 0.0
    %759 = vmatpush1.msra.mxu0 0.0
    %760 = vmatprep.subr.mxu0 0.0
    %761 = vmatpush1.msra.mxu0 0.0
    %762 = vmatprep.subr.mxu0 0.0
    %763 = vmatpush1.msra.mxu0 0.0
    %764 = vmatprep.subr.mxu0 0.0
    %765 = vmatpush1.msra.mxu0 0.0
    %766 = vmatprep.subr.mxu0 0.0
    %767 = vmatpush1.msra.mxu0 0.0
    %768 = vmatprep.subr.mxu0 0.0
    %769 = vmatpush1.msra.mxu0 0.0
    %770 = vmatprep.subr.mxu0 0.0
    %771 = vmatpush1.msra.mxu0 0.0
    %772 = vmatprep.subr.mxu0 0.0
    %773 = vmatpush1.msra.mxu0 0.0
    %774 = vmatprep.subr.mxu0 0.0
    %775 = vmatpush1.msra.mxu0 0.0
    %776 = vmatprep.subr.mxu0 0.0
    %777 = vmatpush1.msra.mxu0 0.0
    %778 = vmatprep.subr.mxu0 0.0
    %779 = vmatpush1.msra.mxu0 0.0
    %780 = vmatprep.subr.mxu0 0.0
    %781 = vmatpush1.msra.mxu0 0.0
    %782 = vmatprep.subr.mxu0 0.0
    %783 = vmatpush1.msra.mxu0 0.0
    %784 = vmatprep.subr.mxu0 0.0
    %785 = vmatpush1.msra.mxu0 0.0
    %786 = vmatprep.subr.mxu0 0.0
    %787 = vmatpush1.msra.mxu0 0.0
    %788 = vmatprep.subr.mxu0 0.0
    %789 = vmatpush1.msra.mxu0 0.0
    %790 = vmatprep.subr.mxu0 0.0
    %791 = vmatpush1.msra.mxu0 0.0
    %792 = vmatprep.subr.mxu0 0.0
    %793 = vmatpush1.msra.mxu0 0.0
    %794 = vmatprep.mubr.f32.mxu0 0.0
    %795 = vmatmul.mubr.f32.gmra.mrb[0].mxu0 %v728
    %v796 = vpop.f32.mrb[0].mxu0
    %v797 = vadd.f32 %v726, %v796
    %v798 = vpop.f32.mrb[0].mxu0
    %799 = vdwg.mxu0
    %vm800 = vcmask 50176
    %v801 = vsel %vm800, %v797, -inf
    %802 = vmax.xlane.f32.xlu0 %v801
    %v803 = vpop.xlane.xlu0 %802
    %v804 = vsub.f32 %v797, %v803
    %v805 = vmul.f32 %v804, 1.442695
    %v806 = vpow.pop %v805
    %v807 = vsel %vm800, %v806, 0.0
    %808 = vadd.xlane.f32.xlu0 %v807
    %v809 = vpop.xlane.xlu0 %808
    %v810 = vrcp.pop %v809
    %v811 = vmul.f32 %v806, %v810
    %v812 = vadd.f32 %v811, %v49
    %v813 = vmul.f32 %v812, 100.0
    %v814 = vsel %vm800, %v813, -inf
    %815 = vmax.xlane.f32.xlu0 %v814
    %v816 = vpop.xlane.xlu0 %815
    %v817 = vsub.f32 %v813, %v816
    %v818 = vmul.f32 %v817, 1.442695
    %v819 = vpow.pop %v818
    %v820 = vsel %vm800, %v819, 0.0
    %821 = vadd.xlane.f32.xlu0 %v820
    %v822 = vpop.xlane.xlu0 %821
    %v823 = vrcp.pop %v822
    %v824 = vmul.f32 %v819, %v823
    %vm825 = vcmask 56320
    %v826 = vsel %vm825, %v824, 0.0
    %v827 = vmul.f32 %v826, %v710
    %v828 = vmul.f32 %v826, %v705
    %830 = vrot.lane.b32.xlu0 %v828, 8
    %v831 = vpop.permute.xlu0 %830
    %v833 = vsel %vm59, %v827, %v831
    %v834 = vld [vmem:[#allocation5 + $0x168] sm:$0xff]
    %v835 = vld [vmem:[#allocation5 + $0x170] sm:$0xff]
    %v837 = vsel %vm362, %v833, 0
    %839 = vmatprep.subr.mxu0 0.0
    %840 = vmatpush1.msra.mxu0 %v834
    %841 = vmatprep.subr.mxu0 0.0
    %842 = vmatpush1.msra.mxu0 %v835
    %843 = vmatprep.subr.mxu0 0.0
    %844 = vmatpush1.msra.mxu0 0.0
    %845 = vmatprep.subr.mxu0 0.0
    %846 = vmatpush1.msra.mxu0 0.0
    %847 = vmatprep.subr.mxu0 0.0
    %848 = vmatpush1.msra.mxu0 0.0
    %849 = vmatprep.subr.mxu0 0.0
    %850 = vmatpush1.msra.mxu0 0.0
    %851 = vmatprep.subr.mxu0 0.0
    %852 = vmatpush1.msra.mxu0 0.0
    %853 = vmatprep.subr.mxu0 0.0
    %854 = vmatpush1.msra.mxu0 0.0
    %855 = vmatprep.subr.mxu0 0.0
    %856 = vmatpush1.msra.mxu0 0.0
    %857 = vmatprep.subr.mxu0 0.0
    %858 = vmatpush1.msra.mxu0 0.0
    %859 = vmatprep.subr.mxu0 0.0
    %860 = vmatpush1.msra.mxu0 0.0
    %861 = vmatprep.subr.mxu0 0.0
    %862 = vmatpush1.msra.mxu0 0.0
    %863 = vmatprep.subr.mxu0 0.0
    %864 = vmatpush1.msra.mxu0 0.0
    %865 = vmatprep.subr.mxu0 0.0
    %866 = vmatpush1.msra.mxu0 0.0
    %867 = vmatprep.subr.mxu0 0.0
    %868 = vmatpush1.msra.mxu0 0.0
    %869 = vmatprep.subr.mxu0 0.0
    %870 = vmatpush1.msra.mxu0 0.0
    %871 = vmatprep.subr.mxu0 0.0
    %872 = vmatpush1.msra.mxu0 0.0
    %873 = vmatprep.subr.mxu0 0.0
    %874 = vmatpush1.msra.mxu0 0.0
    %875 = vmatprep.subr.mxu0 0.0
    %876 = vmatpush1.msra.mxu0 0.0
    %877 = vmatprep.subr.mxu0 0.0
    %878 = vmatpush1.msra.mxu0 0.0
    %879 = vmatprep.subr.mxu0 0.0
    %880 = vmatpush1.msra.mxu0 0.0
    %881 = vmatprep.subr.mxu0 0.0
    %882 = vmatpush1.msra.mxu0 0.0
    %883 = vmatprep.subr.mxu0 0.0
    %884 = vmatpush1.msra.mxu0 0.0
    %885 = vmatprep.subr.mxu0 0.0
    %886 = vmatpush1.msra.mxu0 0.0
    %887 = vmatprep.subr.mxu0 0.0
    %888 = vmatpush1.msra.mxu0 0.0
    %889 = vmatprep.subr.mxu0 0.0
    %890 = vmatpush1.msra.mxu0 0.0
    %891 = vmatprep.subr.mxu0 0.0
    %892 = vmatpush1.msra.mxu0 0.0
    %893 = vmatprep.subr.mxu0 0.0
    %894 = vmatpush1.msra.mxu0 0.0
    %895 = vmatprep.subr.mxu0 0.0
    %896 = vmatpush1.msra.mxu0 0.0
    %897 = vmatprep.subr.mxu0 0.0
    %898 = vmatpush1.msra.mxu0 0.0
    %899 = vmatprep.subr.mxu0 0.0
    %900 = vmatpush1.msra.mxu0 0.0
    %901 = vmatprep.subr.mxu0 0.0
    %902 = vmatpush1.msra.mxu0 0.0
    %903 = vmatprep.mubr.f32.mxu0 0.0
    %904 = vmatmul.mubr.f32.gmra.mrb[0].mxu0 %v837
    %v905 = vpop.f32.mrb[0].mxu0
    %v906 = vadd.f32 0.0, %v905
    %v907 = vpop.f32.mrb[0].mxu0
    %908 = vdwg.mxu0
    %v909 = vadd.f32 %v797, %v906
    %vm910 = vcmask 320768
    %v911 = vsel %vm910, %v909, -inf
    %912 = vmax.xlane.f32.xlu0 %v911
    %v913 = vpop.xlane.xlu0 %912
    %v914 = vsub.f32 %v909, %v913
    %v915 = vmul.f32 %v914, 1.442695
    %v916 = vpow.pop %v915
    %918 = vrot.lane.b32.xlu0 %v916, 96
    %v919 = vpop.permute.xlu0 %918
    %vm921 = vcmask 58368
    %v922 = vsel %vm921, %v919, 0.0
    %923 = vadd.xlane.f32.xlu0 %v922
    %v924 = vpop.xlane.xlu0 %923
    %v925 = vrcp.pop %v924
    %v926 = vmul.f32 %v916, %v925
    %v927 = vadd.f32 %v926, %v49
    %v928 = vmul.f32 %v927, 100.0
    %v929 = vsel %vm910, %v928, -inf
    %930 = vmax.xlane.f32.xlu0 %v929
    %v931 = vpop.xlane.xlu0 %930
    %v932 = vsub.f32 %v928, %v931
    %v933 = vmul.f32 %v932, 1.442695
    %v934 = vpow.pop %v933
    %936 = vrot.lane.b32.xlu0 %v934, 96
    %v937 = vpop.permute.xlu0 %936
    %v939 = vsel %vm921, %v937, 0.0
    %940 = vadd.xlane.f32.xlu0 %v939
    %v941 = vpop.xlane.xlu0 %940
    %v942 = vrcp.pop %v941
    %v943 = vmul.f32 %v934, %v942
    %v944 = vmul.f32 %v943, %v710
    %v945 = vmul.f32 %v943, %v705
    %947 = vrot.lane.b32.xlu0 %v944, 96
    %v948 = vpop.permute.xlu0 %947
    %951 = vrot.lane.b32.xlu0 %v945, 104
    %v952 = vpop.permute.xlu0 %951
    %v954 = vsel %vm59, %v948, %v952
    %v955 = vld [vmem:[#allocation5 + $0x178] sm:$0xff]
    %v956 = vld [vmem:[#allocation5 + $0x180] sm:$0xff]
    %v958 = vsel %vm362, %v954, 0
    %960 = vmatprep.subr.mxu0 0.0
    %961 = vmatpush1.msra.mxu0 %v955
    %962 = vmatprep.subr.mxu0 0.0
    %963 = vmatpush1.msra.mxu0 %v956
    %964 = vmatprep.subr.mxu0 0.0
    %965 = vmatpush1.msra.mxu0 0.0
    %966 = vmatprep.subr.mxu0 0.0
    %967 = vmatpush1.msra.mxu0 0.0
    %968 = vmatprep.subr.mxu0 0.0
    %969 = vmatpush1.msra.mxu0 0.0
    %970 = vmatprep.subr.mxu0 0.0
    %971 = vmatpush1.msra.mxu0 0.0
    %972 = vmatprep.subr.mxu0 0.0
    %973 = vmatpush1.msra.mxu0 0.0
    %974 = vmatprep.subr.mxu0 0.0
    %975 = vmatpush1.msra.mxu0 0.0
    %976 = vmatprep.subr.mxu0 0.0
    %977 = vmatpush1.msra.mxu0 0.0
    %978 = vmatprep.subr.mxu0 0.0
    %979 = vmatpush1.msra.mxu0 0.0
    %980 = vmatprep.subr.mxu0 0.0
    %981 = vmatpush1.msra.mxu0 0.0
    %982 = vmatprep.subr.mxu0 0.0
    %983 = vmatpush1.msra.mxu0 0.0
    %984 = vmatprep.subr.mxu0 0.0
    %985 = vmatpush1.msra.mxu0 0.0
    %986 = vmatprep.subr.mxu0 0.0
    %987 = vmatpush1.msra.mxu0 0.0
    %988 = vmatprep.subr.mxu0 0.0
    %989 = vmatpush1.msra.mxu0 0.0
    %990 = vmatprep.subr.mxu0 0.0
    %991 = vmatpush1.msra.mxu0 0.0
    %992 = vmatprep.subr.mxu0 0.0
    %993 = vmatpush1.msra.mxu0 0.0
    %994 = vmatprep.subr.mxu0 0.0
    %995 = vmatpush1.msra.mxu0 0.0
    %996 = vmatprep.subr.mxu0 0.0
    %997 = vmatpush1.msra.mxu0 0.0
    %998 = vmatprep.subr.mxu0 0.0
    %999 = vmatpush1.msra.mxu0 0.0
    %1000 = vmatprep.subr.mxu0 0.0
    %1001 = vmatpush1.msra.mxu0 0.0
    %1002 = vmatprep.subr.mxu0 0.0
    %1003 = vmatpush1.msra.mxu0 0.0
    %1004 = vmatprep.subr.mxu0 0.0
    %1005 = vmatpush1.msra.mxu0 0.0
    %1006 = vmatprep.subr.mxu0 0.0
    %1007 = vmatpush1.msra.mxu0 0.0
    %1008 = vmatprep.subr.mxu0 0.0
    %1009 = vmatpush1.msra.mxu0 0.0
    %1010 = vmatprep.subr.mxu0 0.0
    %1011 = vmatpush1.msra.mxu0 0.0
    %1012 = vmatprep.subr.mxu0 0.0
    %1013 = vmatpush1.msra.mxu0 0.0
    %1014 = vmatprep.subr.mxu0 0.0
    %1015 = vmatpush1.msra.mxu0 0.0
    %1016 = vmatprep.subr.mxu0 0.0
    %1017 = vmatpush1.msra.mxu0 0.0
    %1018 = vmatprep.subr.mxu0 0.0
    %1019 = vmatpush1.msra.mxu0 0.0
    %1020 = vmatprep.subr.mxu0 0.0
    %1021 = vmatpush1.msra.mxu0 0.0
    %1022 = vmatprep.subr.mxu0 0.0
    %1023 = vmatpush1.msra.mxu0 0.0
    %1024 = vmatprep.mubr.f32.mxu0 0.0
    %1025 = vmatmul.mubr.f32.gmra.mrb[0].mxu0 %v958
    %v1026 = vpop.f32.mrb[0].mxu0
    %v1027 = vadd.f32 0.0, %v1026
    %v1028 = vpop.f32.mrb[0].mxu0
    %1029 = vdwg.mxu0
    %v1030 = vadd.f32 %v909, %v1027
    %vm1031 = vcmask 583168
    %v1032 = vsel %vm1031, %v1030, -inf
    %1033 = vmax.xlane.f32.xlu0 %v1032
    %v1034 = vpop.xlane.xlu0 %1033
    %v1035 = vsub.f32 %v1030, %v1034
    %v1036 = vmul.f32 %v1035, 1.442695
    %v1037 = vpow.pop %v1036
    %1039 = vrot.lane.b32.xlu0 %v1037, 64
    %v1040 = vpop.permute.xlu0 %1039
    %v1042 = vsel %vm921, %v1040, 0.0
    %1043 = vadd.xlane.f32.xlu0 %v1042
    %v1044 = vpop.xlane.xlu0 %1043
    %v1045 = vrcp.pop %v1044
    %v1046 = vmul.f32 %v1037, %v1045
    %vm1047 = vcmask 812800
    %v1048 = vsel %vm1047, %v1030, -inf
    %1049 = vmax.xlane.f32.xlu0 %v1048
    %v1050 = vpop.xlane.xlu0 %1049
    %v1051 = vsub.f32 %v1030, %v1050
    %v1052 = vmul.f32 %v1051, 1.442695
    %v1053 = vpow.pop %v1052
    %1055 = vrot.lane.b32.xlu0 %v1053, 32
    %v1056 = vpop.permute.xlu0 %1055
    %vm1058 = vcmask 25600
    %v1059 = vsel %vm1058, %v1056, 0.0
    %1060 = vadd.xlane.f32.xlu0 %v1059
    %v1061 = vpop.xlane.xlu0 %1060
    %v1062 = vrcp.pop %v1061
    %v1063 = vmul.f32 %v1053, %v1062
    %v1064 = vsel %vm825, %v811, 0.0
    %v1065 = vsel %vm142, %v1064, %v926
    %v1066 = vsel %vm237, %v1065, 0.0
    %v1067 = vsel %vm609, %v1066, %v1046
    %v1068 = vsel %vm499, %v1067, 0.0
    %v1069 = vsel %vm611, %v1068, %v1063
    %vm1070 = vcmask 818176
    %v1071 = vsel %vm1070, %v1069, 0.0
    %1073 = vrot.lane.b32.xlu0 %v599, 32
    %v1074 = vpop.permute.xlu0 %1073
    %v1076 = vsel %vm142, %v1074, %v593
    %v1077 = vsel %vm609, %v1076, 0.0
    %v1079 = vrot.slane %v1077, 6
    %vm1081 = vcmask 1041408
    %v1082 = vsel %vm1081, %v1071, %v1079
    %v1083 = vsel %vm461, %v1082, 0.0
    %1084 = vst [vmem:[%s3] sm:$0xf] %v1083
    // Predicated region
    $region22: #{simple_model_forward.1} parent=1 // pred_check
      _
    $region23: #{simple_model_forward.1} parent=1 // pred_check_branch
      %1086 = sbr.rel (0) target = $region25
    $region24: #{simple_model_forward.1} parent=1 // pred_region
      _
    $region25: #{simple_model_forward.1} parent=1 // pred_fallthru
      _
    // Predicated region
    $region26: #{simple_model_forward.1} parent=1 // pred_check
      _
    $region27: #{simple_model_forward.1} parent=1 // pred_check_branch
      %1088 = sbr.rel (0) target = $region29
    $region28: #{simple_model_forward.1} parent=1 // pred_region
      _
    $region29: #{simple_model_forward.1} parent=1 // pred_fallthru
      _
    %1089 = vsyncpa [#allocation3], 1
    %1090 = vsyncpa [#allocation4], 1

</llo_original>
